<compile_context>
chip_gen: v5e
topology: v5e:2x2
jax: 0.10.0
libtpu: 0.0.40
codegen_flags: <defaults>
</compile_context>

<pallas_src>
import jax
import jax.numpy as jnp
from jax.experimental import pallas as pl
from jax.experimental.pallas import tpu as pltpu

# Logical (PyTorch) dims.
IN_DIM = 784       # 28 * 28
HID_DIM = 400
LAT_DIM = 20

# TPU-aligned padded dims (lane axis multiples of 128).  The K axis of the
# first matmul is left at 784 (full-extent block); MXU vreg padding is free.
HID_PAD = 512      # 4 * 128
OUT_PAD = 128      # fused heads: [mu(20) | logvar(20) | zeros(88)] -> one lane slab

TB_MAX = 1024      # batch tile: ~1 GFLOP / step, amortizes per-step overhead
MIN_SPLIT = 256    # v7x: split into >=2 grid steps once b_pad >= 2*MIN_SPLIT


def _round_up(n, m):
    return (n + m - 1) // m * m


def _choose_tiling(B):
    """Pick (tb, b_pad) with b_pad = grid * tb, tb % 8 == 0, minimal padding."""
    b_pad = _round_up(B, 8)                       # f32 x / f32 out -> 8-row granularity
    n_steps = pl.cdiv(b_pad, TB_MAX)
    # v7x has 2 TensorCores; make sure the "parallel" batch axis has >=2 steps
    # whenever there is enough batch to split usefully.
    if n_steps == 1 and b_pad >= 2 * MIN_SPLIT:
        n_steps = 2
    tb = _round_up(pl.cdiv(b_pad, n_steps), 8)
    return tb, n_steps * tb


def _encoder_kernel(x_ref, w1_ref, b1_ref, w23_ref, b23_ref, out_ref):
    # x_ref:  (TB, 784)  f32   (cast to bf16 here, not in a separate XLA pass)
    # w1_ref: (784, HID_PAD) bf16 ; b1_ref: (1, HID_PAD) f32
    # w23_ref:(HID_PAD, OUT_PAD) bf16 ; b23_ref: (1, OUT_PAD) f32
    # out_ref:(TB, OUT_PAD) f32
    x_bf16 = x_ref[...].astype(jnp.bfloat16)
    h = jnp.dot(x_bf16, w1_ref[...], preferred_element_type=jnp.float32)
    h = jnp.maximum(h + b1_ref[...], 0.0)                        # ReLU, (TB, HID_PAD)
    out = jnp.dot(h.astype(w23_ref.dtype), w23_ref[...],
                  preferred_element_type=jnp.float32)            # fused mu|logvar heads
    out_ref[...] = out + b23_ref[...]


def pack_params(params):
    """Pad to TPU-aligned shapes, fuse mu/logvar heads, cast weights to bf16.

    Zero padding is exact: padded w1 columns + zero b1 entries give
    h == ReLU(0) == 0, and padded w23 rows/cols are zero, so the sliced
    (un-padded) outputs are unchanged.
    """
    w1, b1, w2, b2, w3, b3 = params
    w1p = jnp.zeros((IN_DIM, HID_PAD), jnp.float32).at[:, :HID_DIM].set(w1)
    b1p = jnp.zeros((1, HID_PAD), jnp.float32).at[:, :HID_DIM].set(b1)
    w23 = jnp.concatenate([w2, w3], axis=1)                      # (400, 40)
    b23 = jnp.concatenate([b2, b3], axis=1)                      # (1, 40)
    w23p = jnp.zeros((HID_PAD, OUT_PAD), jnp.float32).at[:HID_DIM, :2 * LAT_DIM].set(w23)
    b23p = jnp.zeros((1, OUT_PAD), jnp.float32).at[:, :2 * LAT_DIM].set(b23)
    return (w1p.astype(jnp.bfloat16), b1p, w23p.astype(jnp.bfloat16), b23p)


@jax.jit
def encoder_forward(img, packed):
    """img: (N, C, H, W) with C*H*W == 784. Returns (mu, logvar), each (N, 20)."""
    w1p, b1p, w23p, b23p = packed
    B = img.shape[0]
    x = img.reshape(B, -1).astype(jnp.float32)
    assert x.shape[1] == IN_DIM

    tb, b_pad = _choose_tiling(B)
    if b_pad != B:
        x = jnp.pad(x, ((0, b_pad - B), (0, 0)))                 # rows only, rare & tiny

    grid = (b_pad // tb,)
    flops = 2 * b_pad * (IN_DIM * HID_PAD + HID_PAD * OUT_PAD)
    bytes_accessed = (b_pad * IN_DIM * 4                         # x (f32, read once)
                      + w1p.size * 2 + w23p.size * 2             # bf16 weights
                      + (b1p.size + b23p.size) * 4               # f32 biases
                      + b_pad * OUT_PAD * 4)                     # f32 output

    out = pl.pallas_call(
        _encoder_kernel,
        out_shape=jax.ShapeDtypeStruct((b_pad, OUT_PAD), jnp.float32),
        grid=grid,
        in_specs=[
            pl.BlockSpec((tb, IN_DIM), lambda i: (i, 0)),        # x: tiled over batch, full-K block
            pl.BlockSpec((IN_DIM, HID_PAD), lambda i: (0, 0)),   # w1: VMEM-resident
            pl.BlockSpec((1, HID_PAD), lambda i: (0, 0)),        # b1
            pl.BlockSpec((HID_PAD, OUT_PAD), lambda i: (0, 0)),  # fused w2|w3
            pl.BlockSpec((1, OUT_PAD), lambda i: (0, 0)),        # fused b2|b3
        ],
        out_specs=pl.BlockSpec((tb, OUT_PAD), lambda i: (i, 0)),
        compiler_params=pltpu.CompilerParams(
            dimension_semantics=("parallel",),                   # batch shards over TCs on v7x
            vmem_limit_bytes=32 * 1024 * 1024),                  # headroom on v5e's 16 MiB default
        cost_estimate=pl.CostEstimate(flops=flops, transcendentals=0,
                                      bytes_accessed=bytes_accessed),
    )(x, w1p, b1p, w23p, b23p)

    mu = out[:B, :LAT_DIM]
    lv = out[:B, LAT_DIM:2 * LAT_DIM]
    return mu, lv


def init_params(key):
    """Deterministic parameter init (PyTorch module's shapes, stored (in, out))."""
    k1, k2, k3, k4, k5, k6 = jax.random.split(key, 6)
    w1 = jax.random.normal(k1, (IN_DIM, HID_DIM), jnp.float32) * 0.02
    b1 = jax.random.normal(k2, (1, HID_DIM), jnp.float32) * 0.02
    w2 = jax.random.normal(k3, (HID_DIM, LAT_DIM), jnp.float32) * 0.02
    b2 = jax.random.normal(k4, (1, LAT_DIM), jnp.float32) * 0.02
    w3 = jax.random.normal(k5, (HID_DIM, LAT_DIM), jnp.float32) * 0.02
    b3 = jax.random.normal(k6, (1, LAT_DIM), jnp.float32) * 0.02
    return (w1, b1, w2, b2, w3, b3)


def reference_forward(img, params):
    """Pure-f32 reference (matches the PyTorch module)."""
    w1, b1, w2, b2, w3, b3 = params
    x = img.reshape(img.shape[0], -1).astype(jnp.float32)
    h = jnp.maximum(x @ w1 + b1, 0.0)
    return h @ w2 + b2, h @ w3 + b3


def reference_forward_matched(img, params):
    """Reference matching the kernel's bf16-input / f32-accumulate numerics."""
    w1, b1, w2, b2, w3, b3 = params
    q = lambda a: a.astype(jnp.bfloat16).astype(jnp.float32)
    x = q(img.reshape(img.shape[0], -1))
    h = jnp.maximum(x @ q(w1) + b1, 0.0)
    hq = q(h)
    return hq @ q(w2) + b2, hq @ q(w3) + b3


if __name__ == "__main__":
    key = jax.random.PRNGKey(0)
    kp, kx = jax.random.split(key)
    params = init_params(kp)
    packed = pack_params(params)

    # MNIST-like input: batch=8, NCHW (8, 1, 28, 28) -> 784 features.
    img = jax.random.normal(kx, (8, 1, 28, 28), jnp.float32)

    mu, lv = encoder_forward(img, packed)
    jax.block_until_ready((mu, lv))
    assert mu.shape == (8, LAT_DIM) and lv.shape == (8, LAT_DIM)

    mu_f32, lv_f32 = reference_forward(img, params)
    mu_m, lv_m = reference_forward_matched(img, params)
    assert jnp.allclose(mu, mu_m, atol=2e-3, rtol=2e-3)
    assert jnp.allclose(lv, lv_m, atol=2e-3, rtol=2e-3)
    assert jnp.allclose(mu, mu_f32, atol=2e-2, rtol=2e-2)
    assert jnp.allclose(lv, lv_f32, atol=2e-2, rtol=2e-2)

    # Exercise the batch-padding path (B not a multiple of 8).
    img3 = jax.random.normal(kx, (3, 1, 28, 28), jnp.float32)
    mu3, lv3 = encoder_forward(img3, packed)
    jax.block_until_ready((mu3, lv3))
    mu3_ref, lv3_ref = reference_forward(img3, params)
    assert mu3.shape == (3, LAT_DIM) and lv3.shape == (3, LAT_DIM)
    assert jnp.allclose(mu3, mu3_ref, atol=2e-2, rtol=2e-2)
    assert jnp.allclose(lv3, lv3_ref, atol=2e-2, rtol=2e-2)

    print("KERNEL_OK")
</pallas_src>

<mosaic_0001>
module attributes {stable_mosaic.version = 11 : i64} {
  func.func @_encoder_kernel(%arg0: i32, %arg1: memref<8x784xf32, #tpu.memory_space<vmem>>, %arg2: memref<784x512xbf16, #tpu.memory_space<vmem>>, %arg3: memref<1x512xf32, #tpu.memory_space<vmem>>, %arg4: memref<512x128xbf16, #tpu.memory_space<vmem>>, %arg5: memref<1x128xf32, #tpu.memory_space<vmem>>, %arg6: memref<8x128xf32, #tpu.memory_space<vmem>>) attributes {dimension_semantics = [#tpu.dimension_semantics<parallel>], iteration_bounds = array<i64: 1>, scalar_prefetch = 0 : i64, scratch_operands = 0 : i64, tpu.core_type = #tpu.core_type<tc>, window_params = [{transform_indices = @transform_0, window_bounds = array<i64: 8, 784>}, {pipeline_mode = #tpu.pipeline_mode<synchronous>, transform_indices = @transform_1, window_bounds = array<i64: 784, 512>}, {pipeline_mode = #tpu.pipeline_mode<synchronous>, transform_indices = @transform_2, window_bounds = array<i64: 1, 512>}, {pipeline_mode = #tpu.pipeline_mode<synchronous>, transform_indices = @transform_3, window_bounds = array<i64: 512, 128>}, {pipeline_mode = #tpu.pipeline_mode<synchronous>, transform_indices = @transform_4, window_bounds = array<i64: 1, 128>}, {transform_indices = @transform_5, window_bounds = array<i64: 8, 128>}]} {
    %c0 = arith.constant 0 : index
    %c0_0 = arith.constant 0 : index
    %0 = vector.load %arg1[%c0, %c0_0] : memref<8x784xf32, #tpu.memory_space<vmem>>, vector<8x784xf32>
    %1 = arith.truncf %0 : vector<8x784xf32> to vector<8x784xbf16>
    %c0_1 = arith.constant 0 : index
    %c0_2 = arith.constant 0 : index
    %2 = vector.load %arg2[%c0_1, %c0_2] : memref<784x512xbf16, #tpu.memory_space<vmem>>, vector<784x512xbf16>
    %cst = arith.constant dense<0.000000e+00> : vector<8x512xf32>
    %3 = tpu.matmul %1, %2, %cst {dimension_numbers = #tpu.dot_dimension_numbers<[1], [0], [0], [1], [0, 0, 1, 1], [], []>} : vector<8x784xbf16>, vector<784x512xbf16>, vector<8x512xf32> -> vector<8x512xf32>
    %c0_3 = arith.constant 0 : index
    %c0_4 = arith.constant 0 : index
    %4 = vector.load %arg3[%c0_3, %c0_4] : memref<1x512xf32, #tpu.memory_space<vmem>>, vector<1x512xf32>
    %5 = vector.broadcast %4 : vector<1x512xf32> to vector<8x512xf32>
    %6 = arith.addf %3, %5 : vector<8x512xf32>
    %cst_5 = arith.constant 0.000000e+00 : f32
    %7 = vector.broadcast %cst_5 : f32 to vector<8x512xf32>
    %8 = arith.maximumf %6, %7 : vector<8x512xf32>
    %9 = arith.truncf %8 : vector<8x512xf32> to vector<8x512xbf16>
    %c0_6 = arith.constant 0 : index
    %c0_7 = arith.constant 0 : index
    %10 = vector.load %arg4[%c0_6, %c0_7] : memref<512x128xbf16, #tpu.memory_space<vmem>>, vector<512x128xbf16>
    %cst_8 = arith.constant dense<0.000000e+00> : vector<8x128xf32>
    %11 = tpu.matmul %9, %10, %cst_8 {dimension_numbers = #tpu.dot_dimension_numbers<[1], [0], [0], [1], [0, 0, 1, 1], [], []>} : vector<8x512xbf16>, vector<512x128xbf16>, vector<8x128xf32> -> vector<8x128xf32>
    %c0_9 = arith.constant 0 : index
    %c0_10 = arith.constant 0 : index
    %12 = vector.load %arg5[%c0_9, %c0_10] : memref<1x128xf32, #tpu.memory_space<vmem>>, vector<1x128xf32>
    %13 = vector.broadcast %12 : vector<1x128xf32> to vector<8x128xf32>
    %14 = arith.addf %11, %13 : vector<8x128xf32>
    %c0_11 = arith.constant 0 : index
    %c0_12 = arith.constant 0 : index
    %15 = vector.load %arg6[%c0_11, %c0_12] : memref<8x128xf32, #tpu.memory_space<vmem>>, vector<8x128xf32>
    tpu.vector_store %arg6[%c0_11, %c0_12], %14 {strides = array<i32>} : memref<8x128xf32, #tpu.memory_space<vmem>>, vector<8x128xf32>,
    return
  }
  func.func @transform_0(%arg0: i32) -> (i32, i32) {
    %c0_i32 = arith.constant 0 : i32
    %c0_i32_0 = arith.constant 0 : i32
    return %arg0, %c0_i32 : i32, i32
  }
  func.func @transform_1(%arg0: i32) -> (i32, i32) {
    %c0_i32 = arith.constant 0 : i32
    %c0_i32_0 = arith.constant 0 : i32
    %c0_i32_1 = arith.constant 0 : i32
    return %c0_i32, %c0_i32_0 : i32, i32
  }
  func.func @transform_2(%arg0: i32) -> (i32, i32) {
    %c0_i32 = arith.constant 0 : i32
    %c0_i32_0 = arith.constant 0 : i32
    %c0_i32_1 = arith.constant 0 : i32
    return %c0_i32, %c0_i32_0 : i32, i32
  }
  func.func @transform_3(%arg0: i32) -> (i32, i32) {
    %c0_i32 = arith.constant 0 : i32
    %c0_i32_0 = arith.constant 0 : i32
    %c0_i32_1 = arith.constant 0 : i32
    return %c0_i32, %c0_i32_0 : i32, i32
  }
  func.func @transform_4(%arg0: i32) -> (i32, i32) {
    %c0_i32 = arith.constant 0 : i32
    %c0_i32_0 = arith.constant 0 : i32
    %c0_i32_1 = arith.constant 0 : i32
    return %c0_i32, %c0_i32_0 : i32, i32
  }
  func.func @transform_5(%arg0: i32) -> (i32, i32) {
    %c0_i32 = arith.constant 0 : i32
    %c0_i32_0 = arith.constant 0 : i32
    return %arg0, %c0_i32 : i32, i32
  }
}

</mosaic_0001>

<llo_original>
// kernel: encoder_forward.1
$region0: #{encoder_forward.1}
  #allocation0 [shape = 'u32[]', space=smem, size = 0x4, offset = 0x4, fixed_abs, tag = 'smem constant byte address 0x4 - core index']
  #allocation1 [shape = 'u32[72,128]{1,0:T(1,128)}', space=vmem, size = 0x9000, scoped, tag = 'internal scratch']
  %s0 = inlined_call_operand.vmem [shape: f32[8,784], index: 0, kind: input, shape index: {}]
  %s1 = inlined_call_operand.hbm [shape: bf16[784,512], index: 1, kind: input, shape index: {}]
  %s2 = inlined_call_operand.vmem [shape: f32[1,512], index: 2, kind: input, shape index: {}]
  %s3 = inlined_call_operand.vmem [shape: bf16[512,128], index: 3, kind: input, shape index: {}]
  %s4 = inlined_call_operand.vmem [shape: f32[1,128], index: 4, kind: input, shape index: {}]
  %s5 = inlined_call_operand.vmem [shape: f32[8,128], index: 5, kind: output, shape index: {}]
  %s6 = sld [smem:[#allocation0]]
  $region34: #{encoder_forward.1} parent=0
    _
  %s8 = ssub.s32 1, %s6
  %s9 = scalar_select 0, %s8, %s6
  $region1: #{encoder_forward.1} parent=0
    #allocation2 [shape = 'u8[802816]{0}', space=vmem, size = 0xc4000, scoped, tag = 'input window, operand 1, single buffered']
    #allocation3 [shape = 's32[1]{0}', space=sflag, size = 0x4, scoped, tag = 'scoped memory for encoder_forward.1']
    %10 = vsyncpa [#allocation3], 0
    // Predicated region
    $region2: #{encoder_forward.1} parent=1 // pred_check
      _
    $region3: #{encoder_forward.1} parent=1 // pred_check_branch
      %12 = sbr.rel (0) target = $region5
    $region4: #{encoder_forward.1} parent=1 // pred_region
      _
    $region5: #{encoder_forward.1} parent=1 // pred_fallthru
      _
    // Predicated region
    $region6: #{encoder_forward.1} parent=1 // pred_check
      _
    $region7: #{encoder_forward.1} parent=1 // pred_check_branch
      %14 = sbr.rel (0) target = $region9
    $region8: #{encoder_forward.1} parent=1 // pred_region
      %16 = vsyncadd [#allocation3], 0
      %s17 = sshll.u32 %s1, 4
      %s18 = int_to_ptr.hbm [resolvable:$true] %s17
      %s19 = sshll.u32 [#allocation2], 4
      %s20 = int_to_ptr.vmem [resolvable:$true] %s19
      %25 = dma.hbm_to_vmem [thread:$0]  %s18, 25088, %s20, [#allocation3], 256, 256, 16
    $region9: #{encoder_forward.1} parent=1 // pred_fallthru
      _
    // Predicated region
    $region10: #{encoder_forward.1} parent=1 // pred_check
      _
    $region11: #{encoder_forward.1} parent=1 // pred_check_branch
      %27 = sbr.rel (0) target = $region13
    $region12: #{encoder_forward.1} parent=1 // pred_region
      _
    $region13: #{encoder_forward.1} parent=1 // pred_fallthru
      _
    // Predicated region
    $region14: #{encoder_forward.1} parent=1 // pred_check
      _
    $region15: #{encoder_forward.1} parent=1 // pred_check_branch
      %29 = sbr.rel (0) target = $region17
    $region16: #{encoder_forward.1} parent=1 // pred_region
      _
    $region17: #{encoder_forward.1} parent=1 // pred_fallthru
      _
    // Predicated region
    $region18: #{encoder_forward.1} parent=1 // pred_check
      _
    $region19: #{encoder_forward.1} parent=1 // pred_check_branch
      %31 = sbr.rel (0) target = $region21
    $region20: #{encoder_forward.1} parent=1 // pred_region
      _
    $region21: #{encoder_forward.1} parent=1 // pred_fallthru
      _
    // Predicated region
    $region22: #{encoder_forward.1} parent=1 // pred_check
      _
    $region23: #{encoder_forward.1} parent=1 // pred_check_branch
      %33 = sbr.rel (0) target = $region25
    $region24: #{encoder_forward.1} parent=1 // pred_region
      %35 = dma.done [#allocation3], 25088
    $region25: #{encoder_forward.1} parent=1 // pred_fallthru
      _
    %v37 = vld [vmem:[%s0] sm:$0xff]
    %v38 = vld [vmem:[%s0 + $0x8] sm:$0xff]
    %v39 = vld [vmem:[%s0 + $0x10] sm:$0xff]
    %v40 = vld [vmem:[%s0 + $0x18] sm:$0xff]
    %v41 = vld [vmem:[%s0 + $0x20] sm:$0xff]
    %v42 = vld [vmem:[%s0 + $0x28] sm:$0xff]
    %v43 = vld [vmem:[%s0 + $0x30] sm:$0xff]
    %v44 = vpack.c.bf16 %v37, %v37
    %v45 = vpack.c.bf16 %v38, %v38
    %v46 = vpack.c.bf16 %v39, %v39
    %v47 = vpack.c.bf16 %v40, %v40
    %v48 = vpack.c.bf16 %v41, %v41
    %v49 = vpack.c.bf16 %v42, %v42
    %v50 = vpack.c.bf16 %v43, %v43
    %v51 = vld [vmem:[#allocation2] sm:$0xff]
    %v52 = vld [vmem:[#allocation2 + $0x8] sm:$0xff]
    %v53 = vld [vmem:[#allocation2 + $0x10] sm:$0xff]
    %v54 = vld [vmem:[#allocation2 + $0x18] sm:$0xff]
    %v55 = vld [vmem:[#allocation2 + $0x20] sm:$0xff]
    %v56 = vld [vmem:[#allocation2 + $0x28] sm:$0xff]
    %v57 = vld [vmem:[#allocation2 + $0x30] sm:$0xff]
    %v58 = vld [vmem:[#allocation2 + $0x38] sm:$0xff]
    %v59 = vld [vmem:[#allocation2 + $0x40] sm:$0xff]
    %v60 = vld [vmem:[#allocation2 + $0x48] sm:$0xff]
    %v61 = vld [vmem:[#allocation2 + $0x50] sm:$0xff]
    %v62 = vld [vmem:[#allocation2 + $0x58] sm:$0xff]
    %v63 = vld [vmem:[#allocation2 + $0x60] sm:$0xff]
    %v64 = vld [vmem:[#allocation2 + $0x68] sm:$0xff]
    %v65 = vld [vmem:[#allocation2 + $0x70] sm:$0xff]
    %v66 = vld [vmem:[#allocation2 + $0x78] sm:$0xff]
    %v67 = vld [vmem:[#allocation2 + $0x80] sm:$0xff]
    %v68 = vld [vmem:[#allocation2 + $0x88] sm:$0xff]
    %v69 = vld [vmem:[#allocation2 + $0x90] sm:$0xff]
    %v70 = vld [vmem:[#allocation2 + $0x98] sm:$0xff]
    %v71 = vld [vmem:[#allocation2 + $0xa0] sm:$0xff]
    %v72 = vld [vmem:[#allocation2 + $0xa8] sm:$0xff]
    %v73 = vld [vmem:[#allocation2 + $0xb0] sm:$0xff]
    %v74 = vld [vmem:[#allocation2 + $0xb8] sm:$0xff]
    %v75 = vld [vmem:[#allocation2 + $0xc0] sm:$0xff]
    %v76 = vld [vmem:[#allocation2 + $0xc8] sm:$0xff]
    %v77 = vld [vmem:[#allocation2 + $0xd0] sm:$0xff]
    %v78 = vld [vmem:[#allocation2 + $0xd8] sm:$0xff]
    %v79 = vld [vmem:[#allocation2 + $0xe0] sm:$0xff]
    %v80 = vld [vmem:[#allocation2 + $0xe8] sm:$0xff]
    %v81 = vld [vmem:[#allocation2 + $0xf0] sm:$0xff]
    %v82 = vld [vmem:[#allocation2 + $0xf8] sm:$0xff]
    %v83 = vld [vmem:[#allocation2 + $0x100] sm:$0xff]
    %v84 = vld [vmem:[#allocation2 + $0x108] sm:$0xff]
    %v85 = vld [vmem:[#allocation2 + $0x110] sm:$0xff]
    %v86 = vld [vmem:[#allocation2 + $0x118] sm:$0xff]
    %v87 = vld [vmem:[#allocation2 + $0x120] sm:$0xff]
    %v88 = vld [vmem:[#allocation2 + $0x128] sm:$0xff]
    %v89 = vld [vmem:[#allocation2 + $0x130] sm:$0xff]
    %v90 = vld [vmem:[#allocation2 + $0x138] sm:$0xff]
    %v91 = vld [vmem:[#allocation2 + $0x140] sm:$0xff]
    %v92 = vld [vmem:[#allocation2 + $0x148] sm:$0xff]
    %v93 = vld [vmem:[#allocation2 + $0x150] sm:$0xff]
    %v94 = vld [vmem:[#allocation2 + $0x158] sm:$0xff]
    %v95 = vld [vmem:[#allocation2 + $0x160] sm:$0xff]
    %v96 = vld [vmem:[#allocation2 + $0x168] sm:$0xff]
    %v97 = vld [vmem:[#allocation2 + $0x170] sm:$0xff]
    %v98 = vld [vmem:[#allocation2 + $0x178] sm:$0xff]
    %v99 = vld [vmem:[#allocation2 + $0x180] sm:$0xff]
    %v100 = vld [vmem:[#allocation2 + $0x188] sm:$0xff]
    %v101 = vld [vmem:[#allocation2 + $0x190] sm:$0xff]
    %v102 = vld [vmem:[#allocation2 + $0x198] sm:$0xff]
    %v103 = vld [vmem:[#allocation2 + $0x1a0] sm:$0xff]
    %v104 = vld [vmem:[#allocation2 + $0x1a8] sm:$0xff]
    %v105 = vld [vmem:[#allocation2 + $0x1b0] sm:$0xff]
    %v106 = vld [vmem:[#allocation2 + $0x1b8] sm:$0xff]
    %v107 = vld [vmem:[#allocation2 + $0x1c0] sm:$0xff]
    %v108 = vld [vmem:[#allocation2 + $0x1c8] sm:$0xff]
    %v109 = vld [vmem:[#allocation2 + $0x1d0] sm:$0xff]
    %v110 = vld [vmem:[#allocation2 + $0x1d8] sm:$0xff]
    %v111 = vld [vmem:[#allocation2 + $0x1e0] sm:$0xff]
    %v112 = vld [vmem:[#allocation2 + $0x1e8] sm:$0xff]
    %v113 = vld [vmem:[#allocation2 + $0x1f0] sm:$0xff]
    %v114 = vld [vmem:[#allocation2 + $0x1f8] sm:$0xff]
    %v115 = vld [vmem:[#allocation2 + $0x200] sm:$0xff]
    %v116 = vld [vmem:[#allocation2 + $0x208] sm:$0xff]
    %v117 = vld [vmem:[#allocation2 + $0x210] sm:$0xff]
    %v118 = vld [vmem:[#allocation2 + $0x218] sm:$0xff]
    %v119 = vld [vmem:[#allocation2 + $0x220] sm:$0xff]
    %v120 = vld [vmem:[#allocation2 + $0x228] sm:$0xff]
    %v121 = vld [vmem:[#allocation2 + $0x230] sm:$0xff]
    %v122 = vld [vmem:[#allocation2 + $0x238] sm:$0xff]
    %v123 = vld [vmem:[#allocation2 + $0x240] sm:$0xff]
    %v124 = vld [vmem:[#allocation2 + $0x248] sm:$0xff]
    %v125 = vld [vmem:[#allocation2 + $0x250] sm:$0xff]
    %v126 = vld [vmem:[#allocation2 + $0x258] sm:$0xff]
    %v127 = vld [vmem:[#allocation2 + $0x260] sm:$0xff]
    %v128 = vld [vmem:[#allocation2 + $0x268] sm:$0xff]
    %v129 = vld [vmem:[#allocation2 + $0x270] sm:$0xff]
    %v130 = vld [vmem:[#allocation2 + $0x278] sm:$0xff]
    %v131 = vld [vmem:[#allocation2 + $0x280] sm:$0xff]
    %v132 = vld [vmem:[#allocation2 + $0x288] sm:$0xff]
    %v133 = vld [vmem:[#allocation2 + $0x290] sm:$0xff]
    %v134 = vld [vmem:[#allocation2 + $0x298] sm:$0xff]
    %v135 = vld [vmem:[#allocation2 + $0x2a0] sm:$0xff]
    %v136 = vld [vmem:[#allocation2 + $0x2a8] sm:$0xff]
    %v137 = vld [vmem:[#allocation2 + $0x2b0] sm:$0xff]
    %v138 = vld [vmem:[#allocation2 + $0x2b8] sm:$0xff]
    %v139 = vld [vmem:[#allocation2 + $0x2c0] sm:$0xff]
    %v140 = vld [vmem:[#allocation2 + $0x2c8] sm:$0xff]
    %v141 = vld [vmem:[#allocation2 + $0x2d0] sm:$0xff]
    %v142 = vld [vmem:[#allocation2 + $0x2d8] sm:$0xff]
    %v143 = vld [vmem:[#allocation2 + $0x2e0] sm:$0xff]
    %v144 = vld [vmem:[#allocation2 + $0x2e8] sm:$0xff]
    %v145 = vld [vmem:[#allocation2 + $0x2f0] sm:$0xff]
    %v146 = vld [vmem:[#allocation2 + $0x2f8] sm:$0xff]
    %v147 = vld [vmem:[#allocation2 + $0x300] sm:$0xff]
    %v148 = vld [vmem:[#allocation2 + $0x308] sm:$0xff]
    %v149 = vld [vmem:[#allocation2 + $0x310] sm:$0xff]
    %v150 = vld [vmem:[#allocation2 + $0x318] sm:$0xff]
    %v151 = vld [vmem:[#allocation2 + $0x320] sm:$0xff]
    %v152 = vld [vmem:[#allocation2 + $0x328] sm:$0xff]
    %v153 = vld [vmem:[#allocation2 + $0x330] sm:$0xff]
    %v154 = vld [vmem:[#allocation2 + $0x338] sm:$0xff]
    %v155 = vld [vmem:[#allocation2 + $0x340] sm:$0xff]
    %v156 = vld [vmem:[#allocation2 + $0x348] sm:$0xff]
    %v157 = vld [vmem:[#allocation2 + $0x350] sm:$0xff]
    %v158 = vld [vmem:[#allocation2 + $0x358] sm:$0xff]
    %v159 = vld [vmem:[#allocation2 + $0x360] sm:$0xff]
    %v160 = vld [vmem:[#allocation2 + $0x368] sm:$0xff]
    %v161 = vld [vmem:[#allocation2 + $0x370] sm:$0xff]
    %v162 = vld [vmem:[#allocation2 + $0x378] sm:$0xff]
    %v163 = vld [vmem:[#allocation2 + $0x380] sm:$0xff]
    %v164 = vld [vmem:[#allocation2 + $0x388] sm:$0xff]
    %v165 = vld [vmem:[#allocation2 + $0x390] sm:$0xff]
    %v166 = vld [vmem:[#allocation2 + $0x398] sm:$0xff]
    %v167 = vld [vmem:[#allocation2 + $0x3a0] sm:$0xff]
    %v168 = vld [vmem:[#allocation2 + $0x3a8] sm:$0xff]
    %v169 = vld [vmem:[#allocation2 + $0x3b0] sm:$0xff]
    %v170 = vld [vmem:[#allocation2 + $0x3b8] sm:$0xff]
    %v171 = vld [vmem:[#allocation2 + $0x3c0] sm:$0xff]
    %v172 = vld [vmem:[#allocation2 + $0x3c8] sm:$0xff]
    %v173 = vld [vmem:[#allocation2 + $0x3d0] sm:$0xff]
    %v174 = vld [vmem:[#allocation2 + $0x3d8] sm:$0xff]
    %v175 = vld [vmem:[#allocation2 + $0x3e0] sm:$0xff]
    %v176 = vld [vmem:[#allocation2 + $0x3e8] sm:$0xff]
    %v177 = vld [vmem:[#allocation2 + $0x3f0] sm:$0xff]
    %v178 = vld [vmem:[#allocation2 + $0x3f8] sm:$0xff]
    %v179 = vld [vmem:[#allocation2 + $0x400] sm:$0xff]
    %v180 = vld [vmem:[#allocation2 + $0x408] sm:$0xff]
    %v181 = vld [vmem:[#allocation2 + $0x410] sm:$0xff]
    %v182 = vld [vmem:[#allocation2 + $0x418] sm:$0xff]
    %v183 = vld [vmem:[#allocation2 + $0x420] sm:$0xff]
    %v184 = vld [vmem:[#allocation2 + $0x428] sm:$0xff]
    %v185 = vld [vmem:[#allocation2 + $0x430] sm:$0xff]
    %v186 = vld [vmem:[#allocation2 + $0x438] sm:$0xff]
    %v187 = vld [vmem:[#allocation2 + $0x440] sm:$0xff]
    %v188 = vld [vmem:[#allocation2 + $0x448] sm:$0xff]
    %v189 = vld [vmem:[#allocation2 + $0x450] sm:$0xff]
    %v190 = vld [vmem:[#allocation2 + $0x458] sm:$0xff]
    %v191 = vld [vmem:[#allocation2 + $0x460] sm:$0xff]
    %v192 = vld [vmem:[#allocation2 + $0x468] sm:$0xff]
    %v193 = vld [vmem:[#allocation2 + $0x470] sm:$0xff]
    %v194 = vld [vmem:[#allocation2 + $0x478] sm:$0xff]
    %v195 = vld [vmem:[#allocation2 + $0x480] sm:$0xff]
    %v196 = vld [vmem:[#allocation2 + $0x488] sm:$0xff]
    %v197 = vld [vmem:[#allocation2 + $0x490] sm:$0xff]
    %v198 = vld [vmem:[#allocation2 + $0x498] sm:$0xff]
    %v199 = vld [vmem:[#allocation2 + $0x4a0] sm:$0xff]
    %v200 = vld [vmem:[#allocation2 + $0x4a8] sm:$0xff]
    %v201 = vld [vmem:[#allocation2 + $0x4b0] sm:$0xff]
    %v202 = vld [vmem:[#allocation2 + $0x4b8] sm:$0xff]
    %v203 = vld [vmem:[#allocation2 + $0x4c0] sm:$0xff]
    %v204 = vld [vmem:[#allocation2 + $0x4c8] sm:$0xff]
    %v205 = vld [vmem:[#allocation2 + $0x4d0] sm:$0xff]
    %v206 = vld [vmem:[#allocation2 + $0x4d8] sm:$0xff]
    %v207 = vld [vmem:[#allocation2 + $0x4e0] sm:$0xff]
    %v208 = vld [vmem:[#allocation2 + $0x4e8] sm:$0xff]
    %v209 = vld [vmem:[#allocation2 + $0x4f0] sm:$0xff]
    %v210 = vld [vmem:[#allocation2 + $0x4f8] sm:$0xff]
    %v211 = vld [vmem:[#allocation2 + $0x500] sm:$0xff]
    %v212 = vld [vmem:[#allocation2 + $0x508] sm:$0xff]
    %v213 = vld [vmem:[#allocation2 + $0x510] sm:$0xff]
    %v214 = vld [vmem:[#allocation2 + $0x518] sm:$0xff]
    %v215 = vld [vmem:[#allocation2 + $0x520] sm:$0xff]
    %v216 = vld [vmem:[#allocation2 + $0x528] sm:$0xff]
    %v217 = vld [vmem:[#allocation2 + $0x530] sm:$0xff]
    %v218 = vld [vmem:[#allocation2 + $0x538] sm:$0xff]
    %v219 = vld [vmem:[#allocation2 + $0x540] sm:$0xff]
    %v220 = vld [vmem:[#allocation2 + $0x548] sm:$0xff]
    %v221 = vld [vmem:[#allocation2 + $0x550] sm:$0xff]
    %v222 = vld [vmem:[#allocation2 + $0x558] sm:$0xff]
    %v223 = vld [vmem:[#allocation2 + $0x560] sm:$0xff]
    %v224 = vld [vmem:[#allocation2 + $0x568] sm:$0xff]
    %v225 = vld [vmem:[#allocation2 + $0x570] sm:$0xff]
    %v226 = vld [vmem:[#allocation2 + $0x578] sm:$0xff]
    %v227 = vld [vmem:[#allocation2 + $0x580] sm:$0xff]
    %v228 = vld [vmem:[#allocation2 + $0x588] sm:$0xff]
    %v229 = vld [vmem:[#allocation2 + $0x590] sm:$0xff]
    %v230 = vld [vmem:[#allocation2 + $0x598] sm:$0xff]
    %v231 = vld [vmem:[#allocation2 + $0x5a0] sm:$0xff]
    %v232 = vld [vmem:[#allocation2 + $0x5a8] sm:$0xff]
    %v233 = vld [vmem:[#allocation2 + $0x5b0] sm:$0xff]
    %v234 = vld [vmem:[#allocation2 + $0x5b8] sm:$0xff]
    %v235 = vld [vmem:[#allocation2 + $0x5c0] sm:$0xff]
    %v236 = vld [vmem:[#allocation2 + $0x5c8] sm:$0xff]
    %v237 = vld [vmem:[#allocation2 + $0x5d0] sm:$0xff]
    %v238 = vld [vmem:[#allocation2 + $0x5d8] sm:$0xff]
    %v239 = vld [vmem:[#allocation2 + $0x5e0] sm:$0xff]
    %v240 = vld [vmem:[#allocation2 + $0x5e8] sm:$0xff]
    %v241 = vld [vmem:[#allocation2 + $0x5f0] sm:$0xff]
    %v242 = vld [vmem:[#allocation2 + $0x5f8] sm:$0xff]
    %v243 = vld [vmem:[#allocation2 + $0x600] sm:$0xff]
    %v244 = vld [vmem:[#allocation2 + $0x608] sm:$0xff]
    %v245 = vld [vmem:[#allocation2 + $0x610] sm:$0xff]
    %v246 = vld [vmem:[#allocation2 + $0x618] sm:$0xff]
    %v247 = vld [vmem:[%s2] sm:$0xf]
    %v249 = vperm.slane %v247, 0
    %v250 = vperm.slane %v247, 1
    %v251 = vperm.slane %v247, 2
    %v252 = vperm.slane %v247, 3
    %v453 = vunpack.c.l.b16 %v51
    %v454 = vunpack.c.h.b16 %v51
    %v455 = vunpack.c.l.b16 %v52
    %v456 = vunpack.c.h.b16 %v52
    %v457 = vunpack.c.l.b16 %v53
    %v458 = vunpack.c.h.b16 %v53
    %v459 = vunpack.c.l.b16 %v54
    %v460 = vunpack.c.h.b16 %v54
    %v461 = vunpack.c.l.b16 %v55
    %v462 = vunpack.c.h.b16 %v55
    %v463 = vunpack.c.l.b16 %v56
    %v464 = vunpack.c.h.b16 %v56
    %v465 = vunpack.c.l.b16 %v57
    %v466 = vunpack.c.h.b16 %v57
    %v467 = vunpack.c.l.b16 %v58
    %v468 = vunpack.c.h.b16 %v58
    %v469 = vunpack.c.l.b16 %v59
    %v470 = vunpack.c.h.b16 %v59
    %v471 = vunpack.c.l.b16 %v60
    %v472 = vunpack.c.h.b16 %v60
    %v473 = vunpack.c.l.b16 %v61
    %v474 = vunpack.c.h.b16 %v61
    %v475 = vunpack.c.l.b16 %v62
    %v476 = vunpack.c.h.b16 %v62
    %v477 = vunpack.c.l.b16 %v63
    %v478 = vunpack.c.h.b16 %v63
    %v479 = vunpack.c.l.b16 %v64
    %v480 = vunpack.c.h.b16 %v64
    %v481 = vunpack.c.l.b16 %v65
    %v482 = vunpack.c.h.b16 %v65
    %v483 = vunpack.c.l.b16 %v66
    %v484 = vunpack.c.h.b16 %v66
    %v485 = vunpack.c.l.b16 %v67
    %v486 = vunpack.c.h.b16 %v67
    %v487 = vunpack.c.l.b16 %v68
    %v488 = vunpack.c.h.b16 %v68
    %v489 = vunpack.c.l.b16 %v69
    %v490 = vunpack.c.h.b16 %v69
    %v491 = vunpack.c.l.b16 %v70
    %v492 = vunpack.c.h.b16 %v70
    %v493 = vunpack.c.l.b16 %v71
    %v494 = vunpack.c.h.b16 %v71
    %v495 = vunpack.c.l.b16 %v72
    %v496 = vunpack.c.h.b16 %v72
    %v497 = vunpack.c.l.b16 %v73
    %v498 = vunpack.c.h.b16 %v73
    %v499 = vunpack.c.l.b16 %v74
    %v500 = vunpack.c.h.b16 %v74
    %v501 = vunpack.c.l.b16 %v75
    %v502 = vunpack.c.h.b16 %v75
    %v503 = vunpack.c.l.b16 %v76
    %v504 = vunpack.c.h.b16 %v76
    %v505 = vunpack.c.l.b16 %v77
    %v506 = vunpack.c.h.b16 %v77
    %v507 = vunpack.c.l.b16 %v78
    %v508 = vunpack.c.h.b16 %v78
    %v509 = vunpack.c.l.b16 %v79
    %v510 = vunpack.c.h.b16 %v79
    %v511 = vunpack.c.l.b16 %v80
    %v512 = vunpack.c.h.b16 %v80
    %v513 = vunpack.c.l.b16 %v81
    %v514 = vunpack.c.h.b16 %v81
    %v515 = vunpack.c.l.b16 %v82
    %v516 = vunpack.c.h.b16 %v82
    %v517 = vunpack.c.l.b16 %v83
    %v518 = vunpack.c.h.b16 %v83
    %v519 = vunpack.c.l.b16 %v84
    %v520 = vunpack.c.h.b16 %v84
    %v521 = vunpack.c.l.b16 %v85
    %v522 = vunpack.c.h.b16 %v85
    %v523 = vunpack.c.l.b16 %v86
    %v524 = vunpack.c.h.b16 %v86
    %v525 = vunpack.c.l.b16 %v87
    %v526 = vunpack.c.h.b16 %v87
    %v527 = vunpack.c.l.b16 %v88
    %v528 = vunpack.c.h.b16 %v88
    %v529 = vunpack.c.l.b16 %v89
    %v530 = vunpack.c.h.b16 %v89
    %v531 = vunpack.c.l.b16 %v90
    %v532 = vunpack.c.h.b16 %v90
    %v533 = vunpack.c.l.b16 %v91
    %v534 = vunpack.c.h.b16 %v91
    %v535 = vunpack.c.l.b16 %v92
    %v536 = vunpack.c.h.b16 %v92
    %v537 = vunpack.c.l.b16 %v93
    %v538 = vunpack.c.h.b16 %v93
    %v539 = vunpack.c.l.b16 %v94
    %v540 = vunpack.c.h.b16 %v94
    %v541 = vunpack.c.l.b16 %v95
    %v542 = vunpack.c.h.b16 %v95
    %v543 = vunpack.c.l.b16 %v96
    %v544 = vunpack.c.h.b16 %v96
    %v545 = vunpack.c.l.b16 %v97
    %v546 = vunpack.c.h.b16 %v97
    %v547 = vunpack.c.l.b16 %v98
    %v548 = vunpack.c.h.b16 %v98
    %v549 = vunpack.c.l.b16 %v99
    %v550 = vunpack.c.h.b16 %v99
    %v551 = vunpack.c.l.b16 %v100
    %v552 = vunpack.c.h.b16 %v100
    %v553 = vunpack.c.l.b16 %v101
    %v554 = vunpack.c.h.b16 %v101
    %v555 = vunpack.c.l.b16 %v102
    %v556 = vunpack.c.h.b16 %v102
    %v557 = vunpack.c.l.b16 %v103
    %v558 = vunpack.c.h.b16 %v103
    %v559 = vunpack.c.l.b16 %v104
    %v560 = vunpack.c.h.b16 %v104
    %v561 = vunpack.c.l.b16 %v105
    %v562 = vunpack.c.h.b16 %v105
    %v563 = vunpack.c.l.b16 %v106
    %v564 = vunpack.c.h.b16 %v106
    %v565 = vunpack.c.l.b16 %v107
    %v566 = vunpack.c.h.b16 %v107
    %v567 = vunpack.c.l.b16 %v108
    %v568 = vunpack.c.h.b16 %v108
    %v569 = vunpack.c.l.b16 %v109
    %v570 = vunpack.c.h.b16 %v109
    %v571 = vunpack.c.l.b16 %v110
    %v572 = vunpack.c.h.b16 %v110
    %v573 = vunpack.c.l.b16 %v111
    %v574 = vunpack.c.h.b16 %v111
    %v575 = vunpack.c.l.b16 %v112
    %v576 = vunpack.c.h.b16 %v112
    %v577 = vunpack.c.l.b16 %v113
    %v578 = vunpack.c.h.b16 %v113
    %v579 = vunpack.c.l.b16 %v114
    %v580 = vunpack.c.h.b16 %v114
    %v581 = vunpack.c.l.b16 %v115
    %v582 = vunpack.c.h.b16 %v115
    %v583 = vunpack.c.l.b16 %v116
    %v584 = vunpack.c.h.b16 %v116
    %v585 = vunpack.c.l.b16 %v117
    %v586 = vunpack.c.h.b16 %v117
    %v587 = vunpack.c.l.b16 %v118
    %v588 = vunpack.c.h.b16 %v118
    %v589 = vunpack.c.l.b16 %v119
    %v590 = vunpack.c.h.b16 %v119
    %v591 = vunpack.c.l.b16 %v120
    %v592 = vunpack.c.h.b16 %v120
    %v593 = vunpack.c.l.b16 %v121
    %v594 = vunpack.c.h.b16 %v121
    %v595 = vunpack.c.l.b16 %v122
    %v596 = vunpack.c.h.b16 %v122
    %v597 = vunpack.c.l.b16 %v123
    %v598 = vunpack.c.h.b16 %v123
    %v599 = vunpack.c.l.b16 %v124
    %v600 = vunpack.c.h.b16 %v124
    %v601 = vunpack.c.l.b16 %v125
    %v602 = vunpack.c.h.b16 %v125
    %v603 = vunpack.c.l.b16 %v126
    %v604 = vunpack.c.h.b16 %v126
    %v605 = vunpack.c.l.b16 %v127
    %v606 = vunpack.c.h.b16 %v127
    %v607 = vunpack.c.l.b16 %v128
    %v608 = vunpack.c.h.b16 %v128
    %v609 = vunpack.c.l.b16 %v129
    %v610 = vunpack.c.h.b16 %v129
    %v611 = vunpack.c.l.b16 %v130
    %v612 = vunpack.c.h.b16 %v130
    %v613 = vunpack.c.l.b16 %v131
    %v614 = vunpack.c.h.b16 %v131
    %v615 = vunpack.c.l.b16 %v132
    %v616 = vunpack.c.h.b16 %v132
    %v617 = vunpack.c.l.b16 %v133
    %v618 = vunpack.c.h.b16 %v133
    %v619 = vunpack.c.l.b16 %v134
    %v620 = vunpack.c.h.b16 %v134
    %v621 = vunpack.c.l.b16 %v135
    %v622 = vunpack.c.h.b16 %v135
    %v623 = vunpack.c.l.b16 %v136
    %v624 = vunpack.c.h.b16 %v136
    %v625 = vunpack.c.l.b16 %v137
    %v626 = vunpack.c.h.b16 %v137
    %v627 = vunpack.c.l.b16 %v138
    %v628 = vunpack.c.h.b16 %v138
    %v629 = vunpack.c.l.b16 %v139
    %v630 = vunpack.c.h.b16 %v139
    %v631 = vunpack.c.l.b16 %v140
    %v632 = vunpack.c.h.b16 %v140
    %v633 = vunpack.c.l.b16 %v141
    %v634 = vunpack.c.h.b16 %v141
    %v635 = vunpack.c.l.b16 %v142
    %v636 = vunpack.c.h.b16 %v142
    %v637 = vunpack.c.l.b16 %v143
    %v638 = vunpack.c.h.b16 %v143
    %v639 = vunpack.c.l.b16 %v144
    %v640 = vunpack.c.h.b16 %v144
    %v641 = vunpack.c.l.b16 %v145
    %v642 = vunpack.c.h.b16 %v145
    %v643 = vunpack.c.l.b16 %v146
    %v644 = vunpack.c.h.b16 %v146
    %v645 = vunpack.c.l.b16 %v147
    %v646 = vunpack.c.h.b16 %v147
    %v647 = vunpack.c.l.b16 %v148
    %v648 = vunpack.c.h.b16 %v148
    %v649 = vunpack.c.l.b16 %v149
    %v650 = vunpack.c.h.b16 %v149
    %v651 = vunpack.c.l.b16 %v150
    %v652 = vunpack.c.h.b16 %v150
    %v653 = vunpack.c.l.b16 %v151
    %v654 = vunpack.c.h.b16 %v151
    %v655 = vunpack.c.l.b16 %v152
    %v656 = vunpack.c.h.b16 %v152
    %v657 = vunpack.c.l.b16 %v153
    %v658 = vunpack.c.h.b16 %v153
    %v659 = vunpack.c.l.b16 %v154
    %v660 = vunpack.c.h.b16 %v154
    %v661 = vunpack.c.l.b16 %v155
    %v662 = vunpack.c.h.b16 %v155
    %v663 = vunpack.c.l.b16 %v156
    %v664 = vunpack.c.h.b16 %v156
    %v665 = vunpack.c.l.b16 %v157
    %v666 = vunpack.c.h.b16 %v157
    %v667 = vunpack.c.l.b16 %v158
    %v668 = vunpack.c.h.b16 %v158
    %v669 = vunpack.c.l.b16 %v159
    %v670 = vunpack.c.h.b16 %v159
    %v671 = vunpack.c.l.b16 %v160
    %v672 = vunpack.c.h.b16 %v160
    %v673 = vunpack.c.l.b16 %v161
    %v674 = vunpack.c.h.b16 %v161
    %v675 = vunpack.c.l.b16 %v162
    %v676 = vunpack.c.h.b16 %v162
    %v677 = vunpack.c.l.b16 %v163
    %v678 = vunpack.c.h.b16 %v163
    %v679 = vunpack.c.l.b16 %v164
    %v680 = vunpack.c.h.b16 %v164
    %v681 = vunpack.c.l.b16 %v165
    %v682 = vunpack.c.h.b16 %v165
    %v683 = vunpack.c.l.b16 %v166
    %v684 = vunpack.c.h.b16 %v166
    %v685 = vunpack.c.l.b16 %v167
    %v686 = vunpack.c.h.b16 %v167
    %v687 = vunpack.c.l.b16 %v168
    %v688 = vunpack.c.h.b16 %v168
    %v689 = vunpack.c.l.b16 %v169
    %v690 = vunpack.c.h.b16 %v169
    %v691 = vunpack.c.l.b16 %v170
    %v692 = vunpack.c.h.b16 %v170
    %v693 = vunpack.c.l.b16 %v171
    %v694 = vunpack.c.h.b16 %v171
    %v695 = vunpack.c.l.b16 %v172
    %v696 = vunpack.c.h.b16 %v172
    %v697 = vunpack.c.l.b16 %v173
    %v698 = vunpack.c.h.b16 %v173
    %v699 = vunpack.c.l.b16 %v174
    %v700 = vunpack.c.h.b16 %v174
    %v701 = vunpack.c.l.b16 %v175
    %v702 = vunpack.c.h.b16 %v175
    %v703 = vunpack.c.l.b16 %v176
    %v704 = vunpack.c.h.b16 %v176
    %v705 = vunpack.c.l.b16 %v177
    %v706 = vunpack.c.h.b16 %v177
    %v707 = vunpack.c.l.b16 %v178
    %v708 = vunpack.c.h.b16 %v178
    %v709 = vunpack.c.l.b16 %v179
    %v710 = vunpack.c.h.b16 %v179
    %v711 = vunpack.c.l.b16 %v180
    %v712 = vunpack.c.h.b16 %v180
    %v713 = vunpack.c.l.b16 %v181
    %v714 = vunpack.c.h.b16 %v181
    %v715 = vunpack.c.l.b16 %v182
    %v716 = vunpack.c.h.b16 %v182
    %v717 = vunpack.c.l.b16 %v183
    %v718 = vunpack.c.h.b16 %v183
    %v719 = vunpack.c.l.b16 %v184
    %v720 = vunpack.c.h.b16 %v184
    %v721 = vunpack.c.l.b16 %v185
    %v722 = vunpack.c.h.b16 %v185
    %v723 = vunpack.c.l.b16 %v186
    %v724 = vunpack.c.h.b16 %v186
    %v725 = vunpack.c.l.b16 %v187
    %v726 = vunpack.c.h.b16 %v187
    %v727 = vunpack.c.l.b16 %v188
    %v728 = vunpack.c.h.b16 %v188
    %v729 = vunpack.c.l.b16 %v189
    %v730 = vunpack.c.h.b16 %v189
    %v731 = vunpack.c.l.b16 %v190
    %v732 = vunpack.c.h.b16 %v190
    %v733 = vunpack.c.l.b16 %v191
    %v734 = vunpack.c.h.b16 %v191
    %v735 = vunpack.c.l.b16 %v192
    %v736 = vunpack.c.h.b16 %v192
    %v737 = vunpack.c.l.b16 %v193
    %v738 = vunpack.c.h.b16 %v193
    %v739 = vunpack.c.l.b16 %v194
    %v740 = vunpack.c.h.b16 %v194
    %v741 = vunpack.c.l.b16 %v195
    %v742 = vunpack.c.h.b16 %v195
    %v743 = vunpack.c.l.b16 %v196
    %v744 = vunpack.c.h.b16 %v196
    %v745 = vunpack.c.l.b16 %v197
    %v746 = vunpack.c.h.b16 %v197
    %v747 = vunpack.c.l.b16 %v198
    %v748 = vunpack.c.h.b16 %v198
    %v749 = vunpack.c.l.b16 %v199
    %v750 = vunpack.c.h.b16 %v199
    %v751 = vunpack.c.l.b16 %v200
    %v752 = vunpack.c.h.b16 %v200
    %v753 = vunpack.c.l.b16 %v201
    %v754 = vunpack.c.h.b16 %v201
    %v755 = vunpack.c.l.b16 %v202
    %v756 = vunpack.c.h.b16 %v202
    %v757 = vunpack.c.l.b16 %v203
    %v758 = vunpack.c.h.b16 %v203
    %v759 = vunpack.c.l.b16 %v204
    %v760 = vunpack.c.h.b16 %v204
    %v761 = vunpack.c.l.b16 %v205
    %v762 = vunpack.c.h.b16 %v205
    %v763 = vunpack.c.l.b16 %v206
    %v764 = vunpack.c.h.b16 %v206
    %v765 = vunpack.c.l.b16 %v207
    %v766 = vunpack.c.h.b16 %v207
    %v767 = vunpack.c.l.b16 %v208
    %v768 = vunpack.c.h.b16 %v208
    %v769 = vunpack.c.l.b16 %v209
    %v770 = vunpack.c.h.b16 %v209
    %v771 = vunpack.c.l.b16 %v210
    %v772 = vunpack.c.h.b16 %v210
    %v773 = vunpack.c.l.b16 %v211
    %v774 = vunpack.c.h.b16 %v211
    %v775 = vunpack.c.l.b16 %v212
    %v776 = vunpack.c.h.b16 %v212
    %v777 = vunpack.c.l.b16 %v213
    %v778 = vunpack.c.h.b16 %v213
    %v779 = vunpack.c.l.b16 %v214
    %v780 = vunpack.c.h.b16 %v214
    %v781 = vunpack.c.l.b16 %v215
    %v782 = vunpack.c.h.b16 %v215
    %v783 = vunpack.c.l.b16 %v216
    %v784 = vunpack.c.h.b16 %v216
    %v785 = vunpack.c.l.b16 %v217
    %v786 = vunpack.c.h.b16 %v217
    %v787 = vunpack.c.l.b16 %v218
    %v788 = vunpack.c.h.b16 %v218
    %v789 = vunpack.c.l.b16 %v219
    %v790 = vunpack.c.h.b16 %v219
    %v791 = vunpack.c.l.b16 %v220
    %v792 = vunpack.c.h.b16 %v220
    %v793 = vunpack.c.l.b16 %v221
    %v794 = vunpack.c.h.b16 %v221
    %v795 = vunpack.c.l.b16 %v222
    %v796 = vunpack.c.h.b16 %v222
    %v797 = vunpack.c.l.b16 %v223
    %v798 = vunpack.c.h.b16 %v223
    %v799 = vunpack.c.l.b16 %v224
    %v800 = vunpack.c.h.b16 %v224
    %v801 = vunpack.c.l.b16 %v225
    %v802 = vunpack.c.h.b16 %v225
    %v803 = vunpack.c.l.b16 %v226
    %v804 = vunpack.c.h.b16 %v226
    %v805 = vunpack.c.l.b16 %v227
    %v806 = vunpack.c.h.b16 %v227
    %v807 = vunpack.c.l.b16 %v228
    %v808 = vunpack.c.h.b16 %v228
    %v809 = vunpack.c.l.b16 %v229
    %v810 = vunpack.c.h.b16 %v229
    %v811 = vunpack.c.l.b16 %v230
    %v812 = vunpack.c.h.b16 %v230
    %v813 = vunpack.c.l.b16 %v231
    %v814 = vunpack.c.h.b16 %v231
    %v815 = vunpack.c.l.b16 %v232
    %v816 = vunpack.c.h.b16 %v232
    %v817 = vunpack.c.l.b16 %v233
    %v818 = vunpack.c.h.b16 %v233
    %v819 = vunpack.c.l.b16 %v234
    %v820 = vunpack.c.h.b16 %v234
    %v821 = vunpack.c.l.b16 %v235
    %v822 = vunpack.c.h.b16 %v235
    %v823 = vunpack.c.l.b16 %v236
    %v824 = vunpack.c.h.b16 %v236
    %v825 = vunpack.c.l.b16 %v237
    %v826 = vunpack.c.h.b16 %v237
    %v827 = vunpack.c.l.b16 %v238
    %v828 = vunpack.c.h.b16 %v238
    %v829 = vunpack.c.l.b16 %v239
    %v830 = vunpack.c.h.b16 %v239
    %v831 = vunpack.c.l.b16 %v240
    %v832 = vunpack.c.h.b16 %v240
    %v833 = vunpack.c.l.b16 %v241
    %v834 = vunpack.c.h.b16 %v241
    %v835 = vunpack.c.l.b16 %v242
    %v836 = vunpack.c.h.b16 %v242
    %v837 = vunpack.c.l.b16 %v243
    %v838 = vunpack.c.h.b16 %v243
    %v839 = vunpack.c.l.b16 %v244
    %v840 = vunpack.c.h.b16 %v244
    %v841 = vunpack.c.l.b16 %v245
    %v842 = vunpack.c.h.b16 %v245
    %v843 = vunpack.c.l.b16 %v246
    %v844 = vunpack.c.h.b16 %v246
    %v845 = vpack.c.b16 %v457, %v453
    %v846 = vpack.c.b16 %v458, %v454
    %v847 = vpack.c.b16 %v459, %v455
    %v848 = vpack.c.b16 %v460, %v456
    %v849 = vpack.c.b16 %v465, %v461
    %v850 = vpack.c.b16 %v466, %v462
    %v851 = vpack.c.b16 %v467, %v463
    %v852 = vpack.c.b16 %v468, %v464
    %v853 = vpack.c.b16 %v473, %v469
    %v854 = vpack.c.b16 %v474, %v470
    %v855 = vpack.c.b16 %v475, %v471
    %v856 = vpack.c.b16 %v476, %v472
    %v857 = vpack.c.b16 %v481, %v477
    %v858 = vpack.c.b16 %v482, %v478
    %v859 = vpack.c.b16 %v483, %v479
    %v860 = vpack.c.b16 %v484, %v480
    %v861 = vpack.c.b16 %v489, %v485
    %v862 = vpack.c.b16 %v490, %v486
    %v863 = vpack.c.b16 %v491, %v487
    %v864 = vpack.c.b16 %v492, %v488
    %v865 = vpack.c.b16 %v497, %v493
    %v866 = vpack.c.b16 %v498, %v494
    %v867 = vpack.c.b16 %v499, %v495
    %v868 = vpack.c.b16 %v500, %v496
    %v869 = vpack.c.b16 %v505, %v501
    %v870 = vpack.c.b16 %v506, %v502
    %v871 = vpack.c.b16 %v507, %v503
    %v872 = vpack.c.b16 %v508, %v504
    %v873 = vpack.c.b16 %v513, %v509
    %v874 = vpack.c.b16 %v514, %v510
    %v875 = vpack.c.b16 %v515, %v511
    %v876 = vpack.c.b16 %v516, %v512
    %v877 = vpack.c.b16 %v521, %v517
    %v878 = vpack.c.b16 %v522, %v518
    %v879 = vpack.c.b16 %v523, %v519
    %v880 = vpack.c.b16 %v524, %v520
    %v881 = vpack.c.b16 %v529, %v525
    %v882 = vpack.c.b16 %v530, %v526
    %v883 = vpack.c.b16 %v531, %v527
    %v884 = vpack.c.b16 %v532, %v528
    %v885 = vpack.c.b16 %v537, %v533
    %v886 = vpack.c.b16 %v538, %v534
    %v887 = vpack.c.b16 %v539, %v535
    %v888 = vpack.c.b16 %v540, %v536
    %v889 = vpack.c.b16 %v545, %v541
    %v890 = vpack.c.b16 %v546, %v542
    %v891 = vpack.c.b16 %v547, %v543
    %v892 = vpack.c.b16 %v548, %v544
    %v893 = vpack.c.b16 %v553, %v549
    %v894 = vpack.c.b16 %v554, %v550
    %v895 = vpack.c.b16 %v555, %v551
    %v896 = vpack.c.b16 %v556, %v552
    %v897 = vpack.c.b16 %v561, %v557
    %v898 = vpack.c.b16 %v562, %v558
    %v899 = vpack.c.b16 %v563, %v559
    %v900 = vpack.c.b16 %v564, %v560
    %v901 = vpack.c.b16 %v569, %v565
    %v902 = vpack.c.b16 %v570, %v566
    %v903 = vpack.c.b16 %v571, %v567
    %v904 = vpack.c.b16 %v572, %v568
    %v905 = vpack.c.b16 %v577, %v573
    %v906 = vpack.c.b16 %v578, %v574
    %v907 = vpack.c.b16 %v579, %v575
    %v908 = vpack.c.b16 %v580, %v576
    %v909 = vpack.c.b16 %v585, %v581
    %v910 = vpack.c.b16 %v586, %v582
    %v911 = vpack.c.b16 %v587, %v583
    %v912 = vpack.c.b16 %v588, %v584
    %v913 = vpack.c.b16 %v593, %v589
    %v914 = vpack.c.b16 %v594, %v590
    %v915 = vpack.c.b16 %v595, %v591
    %v916 = vpack.c.b16 %v596, %v592
    %v917 = vpack.c.b16 %v601, %v597
    %v918 = vpack.c.b16 %v602, %v598
    %v919 = vpack.c.b16 %v603, %v599
    %v920 = vpack.c.b16 %v604, %v600
    %v921 = vpack.c.b16 %v609, %v605
    %v922 = vpack.c.b16 %v610, %v606
    %v923 = vpack.c.b16 %v611, %v607
    %v924 = vpack.c.b16 %v612, %v608
    %v925 = vpack.c.b16 %v617, %v613
    %v926 = vpack.c.b16 %v618, %v614
    %v927 = vpack.c.b16 %v619, %v615
    %v928 = vpack.c.b16 %v620, %v616
    %v929 = vpack.c.b16 %v625, %v621
    %v930 = vpack.c.b16 %v626, %v622
    %v931 = vpack.c.b16 %v627, %v623
    %v932 = vpack.c.b16 %v628, %v624
    %v933 = vpack.c.b16 %v633, %v629
    %v934 = vpack.c.b16 %v634, %v630
    %v935 = vpack.c.b16 %v635, %v631
    %v936 = vpack.c.b16 %v636, %v632
    %v937 = vpack.c.b16 %v641, %v637
    %v938 = vpack.c.b16 %v642, %v638
    %v939 = vpack.c.b16 %v643, %v639
    %v940 = vpack.c.b16 %v644, %v640
    %v941 = vpack.c.b16 %v649, %v645
    %v942 = vpack.c.b16 %v650, %v646
    %v943 = vpack.c.b16 %v651, %v647
    %v944 = vpack.c.b16 %v652, %v648
    %v945 = vpack.c.b16 %v657, %v653
    %v946 = vpack.c.b16 %v658, %v654
    %v947 = vpack.c.b16 %v659, %v655
    %v948 = vpack.c.b16 %v660, %v656
    %v949 = vpack.c.b16 %v665, %v661
    %v950 = vpack.c.b16 %v666, %v662
    %v951 = vpack.c.b16 %v667, %v663
    %v952 = vpack.c.b16 %v668, %v664
    %v953 = vpack.c.b16 %v673, %v669
    %v954 = vpack.c.b16 %v674, %v670
    %v955 = vpack.c.b16 %v675, %v671
    %v956 = vpack.c.b16 %v676, %v672
    %v957 = vpack.c.b16 %v681, %v677
    %v958 = vpack.c.b16 %v682, %v678
    %v959 = vpack.c.b16 %v683, %v679
    %v960 = vpack.c.b16 %v684, %v680
    %v961 = vpack.c.b16 %v689, %v685
    %v962 = vpack.c.b16 %v690, %v686
    %v963 = vpack.c.b16 %v691, %v687
    %v964 = vpack.c.b16 %v692, %v688
    %v965 = vpack.c.b16 %v697, %v693
    %v966 = vpack.c.b16 %v698, %v694
    %v967 = vpack.c.b16 %v699, %v695
    %v968 = vpack.c.b16 %v700, %v696
    %v969 = vpack.c.b16 %v705, %v701
    %v970 = vpack.c.b16 %v706, %v702
    %v971 = vpack.c.b16 %v707, %v703
    %v972 = vpack.c.b16 %v708, %v704
    %v973 = vpack.c.b16 %v713, %v709
    %v974 = vpack.c.b16 %v714, %v710
    %v975 = vpack.c.b16 %v715, %v711
    %v976 = vpack.c.b16 %v716, %v712
    %v977 = vpack.c.b16 %v721, %v717
    %v978 = vpack.c.b16 %v722, %v718
    %v979 = vpack.c.b16 %v723, %v719
    %v980 = vpack.c.b16 %v724, %v720
    %v981 = vpack.c.b16 %v729, %v725
    %v982 = vpack.c.b16 %v730, %v726
    %v983 = vpack.c.b16 %v731, %v727
    %v984 = vpack.c.b16 %v732, %v728
    %v985 = vpack.c.b16 %v737, %v733
    %v986 = vpack.c.b16 %v738, %v734
    %v987 = vpack.c.b16 %v739, %v735
    %v988 = vpack.c.b16 %v740, %v736
    %v989 = vpack.c.b16 %v745, %v741
    %v990 = vpack.c.b16 %v746, %v742
    %v991 = vpack.c.b16 %v747, %v743
    %v992 = vpack.c.b16 %v748, %v744
    %v993 = vpack.c.b16 %v753, %v749
    %v994 = vpack.c.b16 %v754, %v750
    %v995 = vpack.c.b16 %v755, %v751
    %v996 = vpack.c.b16 %v756, %v752
    %v997 = vpack.c.b16 %v761, %v757
    %v998 = vpack.c.b16 %v762, %v758
    %v999 = vpack.c.b16 %v763, %v759
    %v1000 = vpack.c.b16 %v764, %v760
    %v1001 = vpack.c.b16 %v769, %v765
    %v1002 = vpack.c.b16 %v770, %v766
    %v1003 = vpack.c.b16 %v771, %v767
    %v1004 = vpack.c.b16 %v772, %v768
    %v1005 = vpack.c.b16 %v777, %v773
    %v1006 = vpack.c.b16 %v778, %v774
    %v1007 = vpack.c.b16 %v779, %v775
    %v1008 = vpack.c.b16 %v780, %v776
    %v1009 = vpack.c.b16 %v785, %v781
    %v1010 = vpack.c.b16 %v786, %v782
    %v1011 = vpack.c.b16 %v787, %v783
    %v1012 = vpack.c.b16 %v788, %v784
    %v1013 = vpack.c.b16 %v793, %v789
    %v1014 = vpack.c.b16 %v794, %v790
    %v1015 = vpack.c.b16 %v795, %v791
    %v1016 = vpack.c.b16 %v796, %v792
    %v1017 = vpack.c.b16 %v801, %v797
    %v1018 = vpack.c.b16 %v802, %v798
    %v1019 = vpack.c.b16 %v803, %v799
    %v1020 = vpack.c.b16 %v804, %v800
    %v1021 = vpack.c.b16 %v809, %v805
    %v1022 = vpack.c.b16 %v810, %v806
    %v1023 = vpack.c.b16 %v811, %v807
    %v1024 = vpack.c.b16 %v812, %v808
    %v1025 = vpack.c.b16 %v817, %v813
    %v1026 = vpack.c.b16 %v818, %v814
    %v1027 = vpack.c.b16 %v819, %v815
    %v1028 = vpack.c.b16 %v820, %v816
    %v1029 = vpack.c.b16 %v825, %v821
    %v1030 = vpack.c.b16 %v826, %v822
    %v1031 = vpack.c.b16 %v827, %v823
    %v1032 = vpack.c.b16 %v828, %v824
    %v1033 = vpack.c.b16 %v833, %v829
    %v1034 = vpack.c.b16 %v834, %v830
    %v1035 = vpack.c.b16 %v835, %v831
    %v1036 = vpack.c.b16 %v836, %v832
    %v1037 = vpack.c.b16 %v841, %v837
    %v1038 = vpack.c.b16 %v842, %v838
    %v1039 = vpack.c.b16 %v843, %v839
    %v1040 = vpack.c.b16 %v844, %v840
    %vm1237 = vcmask 130048
    %v1239 = vsel %vm1237, %v50, 0
    %1241 = vmatpush.bf16.msra.mxu0 %v873
    %1242 = vmatpush.bf16.msra.mxu0 %v869
    %1243 = vmatpush.bf16.msra.mxu0 %v865
    %1244 = vmatpush.bf16.msra.mxu0 %v861
    %1245 = vmatpush.bf16.msra.mxu0 %v857
    %1246 = vmatpush.bf16.msra.mxu0 %v853
    %1247 = vmatpush.bf16.msra.mxu0 %v849
    %1248 = vmatpush.bf16.msra.mxu0 %v845
    %1249 = vmatmul.bf16.gmra.mxu0 %v44
    %v1250 = vpop.f32.mrf.mxu0
    %v1251 = vadd.f32 %v249, %v1250
    %v1252 = vpop.f32.mrf.mxu0
    %1253 = vdwg.mxu0
    %1254 = vmatpush.bf16.msra.mxu0 %v905
    %1255 = vmatpush.bf16.msra.mxu0 %v901
    %1256 = vmatpush.bf16.msra.mxu0 %v897
    %1257 = vmatpush.bf16.msra.mxu0 %v893
    %1258 = vmatpush.bf16.msra.mxu0 %v889
    %1259 = vmatpush.bf16.msra.mxu0 %v885
    %1260 = vmatpush.bf16.msra.mxu0 %v881
    %1261 = vmatpush.bf16.msra.mxu0 %v877
    %1262 = vmatmul.bf16.gmra.mxu0 %v45
    %v1263 = vpop.f32.mrf.mxu0
    %v1264 = vadd.f32 %v1251, %v1263
    %v1265 = vpop.f32.mrf.mxu0
    %1266 = vdwg.mxu0
    %1267 = vmatpush.bf16.msra.mxu0 %v937
    %1268 = vmatpush.bf16.msra.mxu0 %v933
    %1269 = vmatpush.bf16.msra.mxu0 %v929
    %1270 = vmatpush.bf16.msra.mxu0 %v925
    %1271 = vmatpush.bf16.msra.mxu0 %v921
    %1272 = vmatpush.bf16.msra.mxu0 %v917
    %1273 = vmatpush.bf16.msra.mxu0 %v913
    %1274 = vmatpush.bf16.msra.mxu0 %v909
    %1275 = vmatmul.bf16.gmra.mxu0 %v46
    %v1276 = vpop.f32.mrf.mxu0
    %v1277 = vadd.f32 %v1264, %v1276
    %v1278 = vpop.f32.mrf.mxu0
    %1279 = vdwg.mxu0
    %1280 = vmatpush.bf16.msra.mxu0 %v969
    %1281 = vmatpush.bf16.msra.mxu0 %v965
    %1282 = vmatpush.bf16.msra.mxu0 %v961
    %1283 = vmatpush.bf16.msra.mxu0 %v957
    %1284 = vmatpush.bf16.msra.mxu0 %v953
    %1285 = vmatpush.bf16.msra.mxu0 %v949
    %1286 = vmatpush.bf16.msra.mxu0 %v945
    %1287 = vmatpush.bf16.msra.mxu0 %v941
    %1288 = vmatmul.bf16.gmra.mxu0 %v47
    %v1289 = vpop.f32.mrf.mxu0
    %v1290 = vadd.f32 %v1277, %v1289
    %v1291 = vpop.f32.mrf.mxu0
    %1292 = vdwg.mxu0
    %1293 = vmatpush.bf16.msra.mxu0 %v1001
    %1294 = vmatpush.bf16.msra.mxu0 %v997
    %1295 = vmatpush.bf16.msra.mxu0 %v993
    %1296 = vmatpush.bf16.msra.mxu0 %v989
    %1297 = vmatpush.bf16.msra.mxu0 %v985
    %1298 = vmatpush.bf16.msra.mxu0 %v981
    %1299 = vmatpush.bf16.msra.mxu0 %v977
    %1300 = vmatpush.bf16.msra.mxu0 %v973
    %1301 = vmatmul.bf16.gmra.mxu0 %v48
    %v1302 = vpop.f32.mrf.mxu0
    %v1303 = vadd.f32 %v1290, %v1302
    %v1304 = vpop.f32.mrf.mxu0
    %1305 = vdwg.mxu0
    %1306 = vmatpush.bf16.msra.mxu0 %v1033
    %1307 = vmatpush.bf16.msra.mxu0 %v1029
    %1308 = vmatpush.bf16.msra.mxu0 %v1025
    %1309 = vmatpush.bf16.msra.mxu0 %v1021
    %1310 = vmatpush.bf16.msra.mxu0 %v1017
    %1311 = vmatpush.bf16.msra.mxu0 %v1013
    %1312 = vmatpush.bf16.msra.mxu0 %v1009
    %1313 = vmatpush.bf16.msra.mxu0 %v1005
    %1314 = vmatmul.bf16.gmra.mxu0 %v49
    %v1315 = vpop.f32.mrf.mxu0
    %v1316 = vadd.f32 %v1303, %v1315
    %v1317 = vpop.f32.mrf.mxu0
    %1318 = vdwg.mxu0
    %1319 = vmatpush.bf16.msra.mxu0 0
    %1320 = vmatpush.bf16.msra.mxu0 0
    %1321 = vmatpush.bf16.msra.mxu0 0
    %1322 = vmatpush.bf16.msra.mxu0 0
    %1323 = vmatpush.bf16.msra.mxu0 0
    %1324 = vmatpush.bf16.msra.mxu0 0
    %1325 = vmatpush.bf16.msra.mxu0 0
    %1326 = vmatpush.bf16.msra.mxu0 %v1037
    %1327 = vmatmul.bf16.gmra.mxu0 %v1239
    %v1328 = vpop.f32.mrf.mxu0
    %v1329 = vadd.f32 %v1316, %v1328
    %v1330 = vpop.f32.mrf.mxu0
    %1331 = vdwg.mxu0
    %1332 = vmatpush.bf16.msra.mxu0 %v874
    %1333 = vmatpush.bf16.msra.mxu0 %v870
    %1334 = vmatpush.bf16.msra.mxu0 %v866
    %1335 = vmatpush.bf16.msra.mxu0 %v862
    %1336 = vmatpush.bf16.msra.mxu0 %v858
    %1337 = vmatpush.bf16.msra.mxu0 %v854
    %1338 = vmatpush.bf16.msra.mxu0 %v850
    %1339 = vmatpush.bf16.msra.mxu0 %v846
    %1340 = vmatmul.bf16.gmra.mxu0 %v44
    %v1341 = vpop.f32.mrf.mxu0
    %v1342 = vadd.f32 %v250, %v1341
    %v1343 = vpop.f32.mrf.mxu0
    %1344 = vdwg.mxu0
    %1345 = vmatpush.bf16.msra.mxu0 %v906
    %1346 = vmatpush.bf16.msra.mxu0 %v902
    %1347 = vmatpush.bf16.msra.mxu0 %v898
    %1348 = vmatpush.bf16.msra.mxu0 %v894
    %1349 = vmatpush.bf16.msra.mxu0 %v890
    %1350 = vmatpush.bf16.msra.mxu0 %v886
    %1351 = vmatpush.bf16.msra.mxu0 %v882
    %1352 = vmatpush.bf16.msra.mxu0 %v878
    %1353 = vmatmul.bf16.gmra.mxu0 %v45
    %v1354 = vpop.f32.mrf.mxu0
    %v1355 = vadd.f32 %v1342, %v1354
    %v1356 = vpop.f32.mrf.mxu0
    %1357 = vdwg.mxu0
    %1358 = vmatpush.bf16.msra.mxu0 %v938
    %1359 = vmatpush.bf16.msra.mxu0 %v934
    %1360 = vmatpush.bf16.msra.mxu0 %v930
    %1361 = vmatpush.bf16.msra.mxu0 %v926
    %1362 = vmatpush.bf16.msra.mxu0 %v922
    %1363 = vmatpush.bf16.msra.mxu0 %v918
    %1364 = vmatpush.bf16.msra.mxu0 %v914
    %1365 = vmatpush.bf16.msra.mxu0 %v910
    %1366 = vmatmul.bf16.gmra.mxu0 %v46
    %v1367 = vpop.f32.mrf.mxu0
    %v1368 = vadd.f32 %v1355, %v1367
    %v1369 = vpop.f32.mrf.mxu0
    %1370 = vdwg.mxu0
    %1371 = vmatpush.bf16.msra.mxu0 %v970
    %1372 = vmatpush.bf16.msra.mxu0 %v966
    %1373 = vmatpush.bf16.msra.mxu0 %v962
    %1374 = vmatpush.bf16.msra.mxu0 %v958
    %1375 = vmatpush.bf16.msra.mxu0 %v954
    %1376 = vmatpush.bf16.msra.mxu0 %v950
    %1377 = vmatpush.bf16.msra.mxu0 %v946
    %1378 = vmatpush.bf16.msra.mxu0 %v942
    %1379 = vmatmul.bf16.gmra.mxu0 %v47
    %v1380 = vpop.f32.mrf.mxu0
    %v1381 = vadd.f32 %v1368, %v1380
    %v1382 = vpop.f32.mrf.mxu0
    %1383 = vdwg.mxu0
    %1384 = vmatpush.bf16.msra.mxu0 %v1002
    %1385 = vmatpush.bf16.msra.mxu0 %v998
    %1386 = vmatpush.bf16.msra.mxu0 %v994
    %1387 = vmatpush.bf16.msra.mxu0 %v990
    %1388 = vmatpush.bf16.msra.mxu0 %v986
    %1389 = vmatpush.bf16.msra.mxu0 %v982
    %1390 = vmatpush.bf16.msra.mxu0 %v978
    %1391 = vmatpush.bf16.msra.mxu0 %v974
    %1392 = vmatmul.bf16.gmra.mxu0 %v48
    %v1393 = vpop.f32.mrf.mxu0
    %v1394 = vadd.f32 %v1381, %v1393
    %v1395 = vpop.f32.mrf.mxu0
    %1396 = vdwg.mxu0
    %1397 = vmatpush.bf16.msra.mxu0 %v1034
    %1398 = vmatpush.bf16.msra.mxu0 %v1030
    %1399 = vmatpush.bf16.msra.mxu0 %v1026
    %1400 = vmatpush.bf16.msra.mxu0 %v1022
    %1401 = vmatpush.bf16.msra.mxu0 %v1018
    %1402 = vmatpush.bf16.msra.mxu0 %v1014
    %1403 = vmatpush.bf16.msra.mxu0 %v1010
    %1404 = vmatpush.bf16.msra.mxu0 %v1006
    %1405 = vmatmul.bf16.gmra.mxu0 %v49
    %v1406 = vpop.f32.mrf.mxu0
    %v1407 = vadd.f32 %v1394, %v1406
    %v1408 = vpop.f32.mrf.mxu0
    %1409 = vdwg.mxu0
    %1410 = vmatpush.bf16.msra.mxu0 0
    %1411 = vmatpush.bf16.msra.mxu0 0
    %1412 = vmatpush.bf16.msra.mxu0 0
    %1413 = vmatpush.bf16.msra.mxu0 0
    %1414 = vmatpush.bf16.msra.mxu0 0
    %1415 = vmatpush.bf16.msra.mxu0 0
    %1416 = vmatpush.bf16.msra.mxu0 0
    %1417 = vmatpush.bf16.msra.mxu0 %v1038
    %1418 = vmatmul.bf16.gmra.mxu0 %v1239
    %v1419 = vpop.f32.mrf.mxu0
    %v1420 = vadd.f32 %v1407, %v1419
    %v1421 = vpop.f32.mrf.mxu0
    %1422 = vdwg.mxu0
    %1423 = vmatpush.bf16.msra.mxu0 %v875
    %1424 = vmatpush.bf16.msra.mxu0 %v871
    %1425 = vmatpush.bf16.msra.mxu0 %v867
    %1426 = vmatpush.bf16.msra.mxu0 %v863
    %1427 = vmatpush.bf16.msra.mxu0 %v859
    %1428 = vmatpush.bf16.msra.mxu0 %v855
    %1429 = vmatpush.bf16.msra.mxu0 %v851
    %1430 = vmatpush.bf16.msra.mxu0 %v847
    %1431 = vmatmul.bf16.gmra.mxu0 %v44
    %v1432 = vpop.f32.mrf.mxu0
    %v1433 = vadd.f32 %v251, %v1432
    %v1434 = vpop.f32.mrf.mxu0
    %1435 = vdwg.mxu0
    %1436 = vmatpush.bf16.msra.mxu0 %v907
    %1437 = vmatpush.bf16.msra.mxu0 %v903
    %1438 = vmatpush.bf16.msra.mxu0 %v899
    %1439 = vmatpush.bf16.msra.mxu0 %v895
    %1440 = vmatpush.bf16.msra.mxu0 %v891
    %1441 = vmatpush.bf16.msra.mxu0 %v887
    %1442 = vmatpush.bf16.msra.mxu0 %v883
    %1443 = vmatpush.bf16.msra.mxu0 %v879
    %1444 = vmatmul.bf16.gmra.mxu0 %v45
    %v1445 = vpop.f32.mrf.mxu0
    %v1446 = vadd.f32 %v1433, %v1445
    %v1447 = vpop.f32.mrf.mxu0
    %1448 = vdwg.mxu0
    %1449 = vmatpush.bf16.msra.mxu0 %v939
    %1450 = vmatpush.bf16.msra.mxu0 %v935
    %1451 = vmatpush.bf16.msra.mxu0 %v931
    %1452 = vmatpush.bf16.msra.mxu0 %v927
    %1453 = vmatpush.bf16.msra.mxu0 %v923
    %1454 = vmatpush.bf16.msra.mxu0 %v919
    %1455 = vmatpush.bf16.msra.mxu0 %v915
    %1456 = vmatpush.bf16.msra.mxu0 %v911
    %1457 = vmatmul.bf16.gmra.mxu0 %v46
    %v1458 = vpop.f32.mrf.mxu0
    %v1459 = vadd.f32 %v1446, %v1458
    %v1460 = vpop.f32.mrf.mxu0
    %1461 = vdwg.mxu0
    %1462 = vmatpush.bf16.msra.mxu0 %v971
    %1463 = vmatpush.bf16.msra.mxu0 %v967
    %1464 = vmatpush.bf16.msra.mxu0 %v963
    %1465 = vmatpush.bf16.msra.mxu0 %v959
    %1466 = vmatpush.bf16.msra.mxu0 %v955
    %1467 = vmatpush.bf16.msra.mxu0 %v951
    %1468 = vmatpush.bf16.msra.mxu0 %v947
    %1469 = vmatpush.bf16.msra.mxu0 %v943
    %1470 = vmatmul.bf16.gmra.mxu0 %v47
    %v1471 = vpop.f32.mrf.mxu0
    %v1472 = vadd.f32 %v1459, %v1471
    %v1473 = vpop.f32.mrf.mxu0
    %1474 = vdwg.mxu0
    %1475 = vmatpush.bf16.msra.mxu0 %v1003
    %1476 = vmatpush.bf16.msra.mxu0 %v999
    %1477 = vmatpush.bf16.msra.mxu0 %v995
    %1478 = vmatpush.bf16.msra.mxu0 %v991
    %1479 = vmatpush.bf16.msra.mxu0 %v987
    %1480 = vmatpush.bf16.msra.mxu0 %v983
    %1481 = vmatpush.bf16.msra.mxu0 %v979
    %1482 = vmatpush.bf16.msra.mxu0 %v975
    %1483 = vmatmul.bf16.gmra.mxu0 %v48
    %v1484 = vpop.f32.mrf.mxu0
    %v1485 = vadd.f32 %v1472, %v1484
    %v1486 = vpop.f32.mrf.mxu0
    %1487 = vdwg.mxu0
    %1488 = vmatpush.bf16.msra.mxu0 %v1035
    %1489 = vmatpush.bf16.msra.mxu0 %v1031
    %1490 = vmatpush.bf16.msra.mxu0 %v1027
    %1491 = vmatpush.bf16.msra.mxu0 %v1023
    %1492 = vmatpush.bf16.msra.mxu0 %v1019
    %1493 = vmatpush.bf16.msra.mxu0 %v1015
    %1494 = vmatpush.bf16.msra.mxu0 %v1011
    %1495 = vmatpush.bf16.msra.mxu0 %v1007
    %1496 = vmatmul.bf16.gmra.mxu0 %v49
    %v1497 = vpop.f32.mrf.mxu0
    %v1498 = vadd.f32 %v1485, %v1497
    %v1499 = vpop.f32.mrf.mxu0
    %1500 = vdwg.mxu0
    %1501 = vmatpush.bf16.msra.mxu0 0
    %1502 = vmatpush.bf16.msra.mxu0 0
    %1503 = vmatpush.bf16.msra.mxu0 0
    %1504 = vmatpush.bf16.msra.mxu0 0
    %1505 = vmatpush.bf16.msra.mxu0 0
    %1506 = vmatpush.bf16.msra.mxu0 0
    %1507 = vmatpush.bf16.msra.mxu0 0
    %1508 = vmatpush.bf16.msra.mxu0 %v1039
    %1509 = vmatmul.bf16.gmra.mxu0 %v1239
    %v1510 = vpop.f32.mrf.mxu0
    %v1511 = vadd.f32 %v1498, %v1510
    %v1512 = vpop.f32.mrf.mxu0
    %1513 = vdwg.mxu0
    %1514 = vmatpush.bf16.msra.mxu0 %v876
    %1515 = vmatpush.bf16.msra.mxu0 %v872
    %1516 = vmatpush.bf16.msra.mxu0 %v868
    %1517 = vmatpush.bf16.msra.mxu0 %v864
    %1518 = vmatpush.bf16.msra.mxu0 %v860
    %1519 = vmatpush.bf16.msra.mxu0 %v856
    %1520 = vmatpush.bf16.msra.mxu0 %v852
    %1521 = vmatpush.bf16.msra.mxu0 %v848
    %1522 = vmatmul.bf16.gmra.mxu0 %v44
    %v1523 = vpop.f32.mrf.mxu0
    %v1524 = vadd.f32 %v252, %v1523
    %v1525 = vpop.f32.mrf.mxu0
    %1526 = vdwg.mxu0
    %1527 = vmatpush.bf16.msra.mxu0 %v908
    %1528 = vmatpush.bf16.msra.mxu0 %v904
    %1529 = vmatpush.bf16.msra.mxu0 %v900
    %1530 = vmatpush.bf16.msra.mxu0 %v896
    %1531 = vmatpush.bf16.msra.mxu0 %v892
    %1532 = vmatpush.bf16.msra.mxu0 %v888
    %1533 = vmatpush.bf16.msra.mxu0 %v884
    %1534 = vmatpush.bf16.msra.mxu0 %v880
    %1535 = vmatmul.bf16.gmra.mxu0 %v45
    %v1536 = vpop.f32.mrf.mxu0
    %v1537 = vadd.f32 %v1524, %v1536
    %v1538 = vpop.f32.mrf.mxu0
    %1539 = vdwg.mxu0
    %1540 = vmatpush.bf16.msra.mxu0 %v940
    %1541 = vmatpush.bf16.msra.mxu0 %v936
    %1542 = vmatpush.bf16.msra.mxu0 %v932
    %1543 = vmatpush.bf16.msra.mxu0 %v928
    %1544 = vmatpush.bf16.msra.mxu0 %v924
    %1545 = vmatpush.bf16.msra.mxu0 %v920
    %1546 = vmatpush.bf16.msra.mxu0 %v916
    %1547 = vmatpush.bf16.msra.mxu0 %v912
    %1548 = vmatmul.bf16.gmra.mxu0 %v46
    %v1549 = vpop.f32.mrf.mxu0
    %v1550 = vadd.f32 %v1537, %v1549
    %v1551 = vpop.f32.mrf.mxu0
    %1552 = vdwg.mxu0
    %1553 = vmatpush.bf16.msra.mxu0 %v972
    %1554 = vmatpush.bf16.msra.mxu0 %v968
    %1555 = vmatpush.bf16.msra.mxu0 %v964
    %1556 = vmatpush.bf16.msra.mxu0 %v960
    %1557 = vmatpush.bf16.msra.mxu0 %v956
    %1558 = vmatpush.bf16.msra.mxu0 %v952
    %1559 = vmatpush.bf16.msra.mxu0 %v948
    %1560 = vmatpush.bf16.msra.mxu0 %v944
    %1561 = vmatmul.bf16.gmra.mxu0 %v47
    %v1562 = vpop.f32.mrf.mxu0
    %v1563 = vadd.f32 %v1550, %v1562
    %v1564 = vpop.f32.mrf.mxu0
    %1565 = vdwg.mxu0
    %1566 = vmatpush.bf16.msra.mxu0 %v1004
    %1567 = vmatpush.bf16.msra.mxu0 %v1000
    %1568 = vmatpush.bf16.msra.mxu0 %v996
    %1569 = vmatpush.bf16.msra.mxu0 %v992
    %1570 = vmatpush.bf16.msra.mxu0 %v988
    %1571 = vmatpush.bf16.msra.mxu0 %v984
    %1572 = vmatpush.bf16.msra.mxu0 %v980
    %1573 = vmatpush.bf16.msra.mxu0 %v976
    %1574 = vmatmul.bf16.gmra.mxu0 %v48
    %v1575 = vpop.f32.mrf.mxu0
    %v1576 = vadd.f32 %v1563, %v1575
    %v1577 = vpop.f32.mrf.mxu0
    %1578 = vdwg.mxu0
    %1579 = vmatpush.bf16.msra.mxu0 %v1036
    %1580 = vmatpush.bf16.msra.mxu0 %v1032
    %1581 = vmatpush.bf16.msra.mxu0 %v1028
    %1582 = vmatpush.bf16.msra.mxu0 %v1024
    %1583 = vmatpush.bf16.msra.mxu0 %v1020
    %1584 = vmatpush.bf16.msra.mxu0 %v1016
    %1585 = vmatpush.bf16.msra.mxu0 %v1012
    %1586 = vmatpush.bf16.msra.mxu0 %v1008
    %1587 = vmatmul.bf16.gmra.mxu0 %v49
    %v1588 = vpop.f32.mrf.mxu0
    %v1589 = vadd.f32 %v1576, %v1588
    %v1590 = vpop.f32.mrf.mxu0
    %1591 = vdwg.mxu0
    %1592 = vmatpush.bf16.msra.mxu0 0
    %1593 = vmatpush.bf16.msra.mxu0 0
    %1594 = vmatpush.bf16.msra.mxu0 0
    %1595 = vmatpush.bf16.msra.mxu0 0
    %1596 = vmatpush.bf16.msra.mxu0 0
    %1597 = vmatpush.bf16.msra.mxu0 0
    %1598 = vmatpush.bf16.msra.mxu0 0
    %1599 = vmatpush.bf16.msra.mxu0 %v1040
    %1600 = vmatmul.bf16.gmra.mxu0 %v1239
    %v1601 = vpop.f32.mrf.mxu0
    %v1602 = vadd.f32 %v1589, %v1601
    %v1603 = vpop.f32.mrf.mxu0
    %1604 = vdwg.mxu0
    %v1605 = vmax.f32 %v1329, 0.0
    %v1606 = vmax.f32 %v1420, 0.0
    %v1607 = vmax.f32 %v1511, 0.0
    %v1608 = vmax.f32 %v1602, 0.0
    %v1609 = vpack.c.bf16 %v1605, %v1605
    %v1610 = vpack.c.bf16 %v1606, %v1606
    %v1611 = vpack.c.bf16 %v1607, %v1607
    %v1612 = vpack.c.bf16 %v1608, %v1608
    %v1613 = vld [vmem:[%s3] sm:$0xf]
    %v1614 = vld [vmem:[%s3 + $0x4] sm:$0xf]
    %v1615 = vld [vmem:[%s3 + $0x8] sm:$0xf]
    %v1616 = vld [vmem:[%s3 + $0xc] sm:$0xf]
    %v1617 = vld [vmem:[%s3 + $0x10] sm:$0xf]
    %v1618 = vld [vmem:[%s3 + $0x14] sm:$0xf]
    %v1619 = vld [vmem:[%s3 + $0x18] sm:$0xf]
    %v1620 = vld [vmem:[%s3 + $0x1c] sm:$0xf]
    %v1621 = vld [vmem:[%s3 + $0x20] sm:$0xf]
    %v1622 = vld [vmem:[%s3 + $0x24] sm:$0xf]
    %v1623 = vld [vmem:[%s3 + $0x28] sm:$0xf]
    %v1624 = vld [vmem:[%s3 + $0x2c] sm:$0xf]
    %v1625 = vld [vmem:[%s3 + $0x30] sm:$0xf]
    %v1626 = vld [vmem:[%s3 + $0x34] sm:$0xf]
    %v1627 = vld [vmem:[%s3 + $0x38] sm:$0xf]
    %v1628 = vld [vmem:[%s3 + $0x3c] sm:$0xf]
    %v1629 = vld [vmem:[%s3 + $0x40] sm:$0xf]
    %v1630 = vld [vmem:[%s3 + $0x44] sm:$0xf]
    %v1631 = vld [vmem:[%s3 + $0x48] sm:$0xf]
    %v1632 = vld [vmem:[%s3 + $0x4c] sm:$0xf]
    %v1633 = vld [vmem:[%s3 + $0x50] sm:$0xf]
    %v1634 = vld [vmem:[%s3 + $0x54] sm:$0xf]
    %v1635 = vld [vmem:[%s3 + $0x58] sm:$0xf]
    %v1636 = vld [vmem:[%s3 + $0x5c] sm:$0xf]
    %v1637 = vld [vmem:[%s3 + $0x60] sm:$0xf]
    %v1638 = vld [vmem:[%s3 + $0x64] sm:$0xf]
    %v1639 = vld [vmem:[%s3 + $0x68] sm:$0xf]
    %v1640 = vld [vmem:[%s3 + $0x6c] sm:$0xf]
    %v1641 = vld [vmem:[%s3 + $0x70] sm:$0xf]
    %v1642 = vld [vmem:[%s3 + $0x74] sm:$0xf]
    %v1643 = vld [vmem:[%s3 + $0x78] sm:$0xf]
    %v1644 = vld [vmem:[%s3 + $0x7c] sm:$0xf]
    %v1645 = vld [vmem:[%s3 + $0x80] sm:$0xf]
    %v1646 = vld [vmem:[%s3 + $0x84] sm:$0xf]
    %v1647 = vld [vmem:[%s3 + $0x88] sm:$0xf]
    %v1648 = vld [vmem:[%s3 + $0x8c] sm:$0xf]
    %v1649 = vld [vmem:[%s3 + $0x90] sm:$0xf]
    %v1650 = vld [vmem:[%s3 + $0x94] sm:$0xf]
    %v1651 = vld [vmem:[%s3 + $0x98] sm:$0xf]
    %v1652 = vld [vmem:[%s3 + $0x9c] sm:$0xf]
    %v1653 = vld [vmem:[%s3 + $0xa0] sm:$0xf]
    %v1654 = vld [vmem:[%s3 + $0xa4] sm:$0xf]
    %v1655 = vld [vmem:[%s3 + $0xa8] sm:$0xf]
    %v1656 = vld [vmem:[%s3 + $0xac] sm:$0xf]
    %v1657 = vld [vmem:[%s3 + $0xb0] sm:$0xf]
    %v1658 = vld [vmem:[%s3 + $0xb4] sm:$0xf]
    %v1659 = vld [vmem:[%s3 + $0xb8] sm:$0xf]
    %v1660 = vld [vmem:[%s3 + $0xbc] sm:$0xf]
    %v1661 = vld [vmem:[%s3 + $0xc0] sm:$0xf]
    %v1662 = vld [vmem:[%s3 + $0xc4] sm:$0xf]
    %v1663 = vld [vmem:[%s3 + $0xc8] sm:$0xf]
    %v1664 = vld [vmem:[%s3 + $0xcc] sm:$0xf]
    %v1665 = vld [vmem:[%s3 + $0xd0] sm:$0xf]
    %v1666 = vld [vmem:[%s3 + $0xd4] sm:$0xf]
    %v1667 = vld [vmem:[%s3 + $0xd8] sm:$0xf]
    %v1668 = vld [vmem:[%s3 + $0xdc] sm:$0xf]
    %v1669 = vld [vmem:[%s3 + $0xe0] sm:$0xf]
    %v1670 = vld [vmem:[%s3 + $0xe4] sm:$0xf]
    %v1671 = vld [vmem:[%s3 + $0xe8] sm:$0xf]
    %v1672 = vld [vmem:[%s3 + $0xec] sm:$0xf]
    %v1673 = vld [vmem:[%s3 + $0xf0] sm:$0xf]
    %v1674 = vld [vmem:[%s3 + $0xf4] sm:$0xf]
    %v1675 = vld [vmem:[%s3 + $0xf8] sm:$0xf]
    %v1676 = vld [vmem:[%s3 + $0xfc] sm:$0xf]
    %v1677 = vld [vmem:[%s4] sm:$0x1]
    %v1679 = vperm.slane %v1677, 0
    %v1745 = vunpack.c.l.b16 %v1613
    %v1746 = vunpack.c.l.b16 %v1614
    %v1747 = vunpack.c.l.b16 %v1615
    %v1748 = vunpack.c.l.b16 %v1616
    %v1749 = vunpack.c.l.b16 %v1617
    %v1750 = vunpack.c.l.b16 %v1618
    %v1751 = vunpack.c.l.b16 %v1619
    %v1752 = vunpack.c.l.b16 %v1620
    %v1753 = vunpack.c.l.b16 %v1621
    %v1754 = vunpack.c.l.b16 %v1622
    %v1755 = vunpack.c.l.b16 %v1623
    %v1756 = vunpack.c.l.b16 %v1624
    %v1757 = vunpack.c.l.b16 %v1625
    %v1758 = vunpack.c.l.b16 %v1626
    %v1759 = vunpack.c.l.b16 %v1627
    %v1760 = vunpack.c.l.b16 %v1628
    %v1761 = vunpack.c.l.b16 %v1629
    %v1762 = vunpack.c.l.b16 %v1630
    %v1763 = vunpack.c.l.b16 %v1631
    %v1764 = vunpack.c.l.b16 %v1632
    %v1765 = vunpack.c.l.b16 %v1633
    %v1766 = vunpack.c.l.b16 %v1634
    %v1767 = vunpack.c.l.b16 %v1635
    %v1768 = vunpack.c.l.b16 %v1636
    %v1769 = vunpack.c.l.b16 %v1637
    %v1770 = vunpack.c.l.b16 %v1638
    %v1771 = vunpack.c.l.b16 %v1639
    %v1772 = vunpack.c.l.b16 %v1640
    %v1773 = vunpack.c.l.b16 %v1641
    %v1774 = vunpack.c.l.b16 %v1642
    %v1775 = vunpack.c.l.b16 %v1643
    %v1776 = vunpack.c.l.b16 %v1644
    %v1777 = vunpack.c.l.b16 %v1645
    %v1778 = vunpack.c.l.b16 %v1646
    %v1779 = vunpack.c.l.b16 %v1647
    %v1780 = vunpack.c.l.b16 %v1648
    %v1781 = vunpack.c.l.b16 %v1649
    %v1782 = vunpack.c.l.b16 %v1650
    %v1783 = vunpack.c.l.b16 %v1651
    %v1784 = vunpack.c.l.b16 %v1652
    %v1785 = vunpack.c.l.b16 %v1653
    %v1786 = vunpack.c.l.b16 %v1654
    %v1787 = vunpack.c.l.b16 %v1655
    %v1788 = vunpack.c.l.b16 %v1656
    %v1789 = vunpack.c.l.b16 %v1657
    %v1790 = vunpack.c.l.b16 %v1658
    %v1791 = vunpack.c.l.b16 %v1659
    %v1792 = vunpack.c.l.b16 %v1660
    %v1793 = vunpack.c.l.b16 %v1661
    %v1794 = vunpack.c.l.b16 %v1662
    %v1795 = vunpack.c.l.b16 %v1663
    %v1796 = vunpack.c.l.b16 %v1664
    %v1797 = vunpack.c.l.b16 %v1665
    %v1798 = vunpack.c.l.b16 %v1666
    %v1799 = vunpack.c.l.b16 %v1667
    %v1800 = vunpack.c.l.b16 %v1668
    %v1801 = vunpack.c.l.b16 %v1669
    %v1802 = vunpack.c.l.b16 %v1670
    %v1803 = vunpack.c.l.b16 %v1671
    %v1804 = vunpack.c.l.b16 %v1672
    %v1805 = vunpack.c.l.b16 %v1673
    %v1806 = vunpack.c.l.b16 %v1674
    %v1807 = vunpack.c.l.b16 %v1675
    %v1808 = vunpack.c.l.b16 %v1676
    %v1809 = vpack.c.b16 %v1746, %v1745
    %v1810 = vpack.c.b16 %v1748, %v1747
    %v1811 = vpack.c.b16 %v1750, %v1749
    %v1812 = vpack.c.b16 %v1752, %v1751
    %v1813 = vpack.c.b16 %v1754, %v1753
    %v1814 = vpack.c.b16 %v1756, %v1755
    %v1815 = vpack.c.b16 %v1758, %v1757
    %v1816 = vpack.c.b16 %v1760, %v1759
    %v1817 = vpack.c.b16 %v1762, %v1761
    %v1818 = vpack.c.b16 %v1764, %v1763
    %v1819 = vpack.c.b16 %v1766, %v1765
    %v1820 = vpack.c.b16 %v1768, %v1767
    %v1821 = vpack.c.b16 %v1770, %v1769
    %v1822 = vpack.c.b16 %v1772, %v1771
    %v1823 = vpack.c.b16 %v1774, %v1773
    %v1824 = vpack.c.b16 %v1776, %v1775
    %v1825 = vpack.c.b16 %v1778, %v1777
    %v1826 = vpack.c.b16 %v1780, %v1779
    %v1827 = vpack.c.b16 %v1782, %v1781
    %v1828 = vpack.c.b16 %v1784, %v1783
    %v1829 = vpack.c.b16 %v1786, %v1785
    %v1830 = vpack.c.b16 %v1788, %v1787
    %v1831 = vpack.c.b16 %v1790, %v1789
    %v1832 = vpack.c.b16 %v1792, %v1791
    %v1833 = vpack.c.b16 %v1794, %v1793
    %v1834 = vpack.c.b16 %v1796, %v1795
    %v1835 = vpack.c.b16 %v1798, %v1797
    %v1836 = vpack.c.b16 %v1800, %v1799
    %v1837 = vpack.c.b16 %v1802, %v1801
    %v1838 = vpack.c.b16 %v1804, %v1803
    %v1839 = vpack.c.b16 %v1806, %v1805
    %v1840 = vpack.c.b16 %v1808, %v1807
    %1873 = vmatpush.bf16.msra.mxu0 %v1816
    %1874 = vmatpush.bf16.msra.mxu0 %v1815
    %1875 = vmatpush.bf16.msra.mxu0 %v1814
    %1876 = vmatpush.bf16.msra.mxu0 %v1813
    %1877 = vmatpush.bf16.msra.mxu0 %v1812
    %1878 = vmatpush.bf16.msra.mxu0 %v1811
    %1879 = vmatpush.bf16.msra.mxu0 %v1810
    %1880 = vmatpush.bf16.msra.mxu0 %v1809
    %1881 = vmatmul.bf16.gmra.mxu0 %v1609
    %v1882 = vpop.f32.mrf.mxu0
    %v1883 = vadd.f32 %v1679, %v1882
    %v1884 = vpop.f32.mrf.mxu0
    %1885 = vdwg.mxu0
    %1886 = vmatpush.bf16.msra.mxu0 %v1824
    %1887 = vmatpush.bf16.msra.mxu0 %v1823
    %1888 = vmatpush.bf16.msra.mxu0 %v1822
    %1889 = vmatpush.bf16.msra.mxu0 %v1821
    %1890 = vmatpush.bf16.msra.mxu0 %v1820
    %1891 = vmatpush.bf16.msra.mxu0 %v1819
    %1892 = vmatpush.bf16.msra.mxu0 %v1818
    %1893 = vmatpush.bf16.msra.mxu0 %v1817
    %1894 = vmatmul.bf16.gmra.mxu0 %v1610
    %v1895 = vpop.f32.mrf.mxu0
    %v1896 = vadd.f32 %v1883, %v1895
    %v1897 = vpop.f32.mrf.mxu0
    %1898 = vdwg.mxu0
    %1899 = vmatpush.bf16.msra.mxu0 %v1832
    %1900 = vmatpush.bf16.msra.mxu0 %v1831
    %1901 = vmatpush.bf16.msra.mxu0 %v1830
    %1902 = vmatpush.bf16.msra.mxu0 %v1829
    %1903 = vmatpush.bf16.msra.mxu0 %v1828
    %1904 = vmatpush.bf16.msra.mxu0 %v1827
    %1905 = vmatpush.bf16.msra.mxu0 %v1826
    %1906 = vmatpush.bf16.msra.mxu0 %v1825
    %1907 = vmatmul.bf16.gmra.mxu0 %v1611
    %v1908 = vpop.f32.mrf.mxu0
    %v1909 = vadd.f32 %v1896, %v1908
    %v1910 = vpop.f32.mrf.mxu0
    %1911 = vdwg.mxu0
    %1912 = vmatpush.bf16.msra.mxu0 %v1840
    %1913 = vmatpush.bf16.msra.mxu0 %v1839
    %1914 = vmatpush.bf16.msra.mxu0 %v1838
    %1915 = vmatpush.bf16.msra.mxu0 %v1837
    %1916 = vmatpush.bf16.msra.mxu0 %v1836
    %1917 = vmatpush.bf16.msra.mxu0 %v1835
    %1918 = vmatpush.bf16.msra.mxu0 %v1834
    %1919 = vmatpush.bf16.msra.mxu0 %v1833
    %1920 = vmatmul.bf16.gmra.mxu0 %v1612
    %v1921 = vpop.f32.mrf.mxu0
    %v1922 = vadd.f32 %v1909, %v1921
    %v1923 = vpop.f32.mrf.mxu0
    %1924 = vdwg.mxu0
    %1925 = vst [vmem:[%s5] sm:$0xff] %v1922
    // Predicated region
    $region26: #{encoder_forward.1} parent=1 // pred_check
      _
    $region27: #{encoder_forward.1} parent=1 // pred_check_branch
      %1927 = sbr.rel (0) target = $region29
    $region28: #{encoder_forward.1} parent=1 // pred_region
      _
    $region29: #{encoder_forward.1} parent=1 // pred_fallthru
      _
    // Predicated region
    $region30: #{encoder_forward.1} parent=1 // pred_check
      _
    $region31: #{encoder_forward.1} parent=1 // pred_check_branch
      %1929 = sbr.rel (0) target = $region33
    $region32: #{encoder_forward.1} parent=1 // pred_region
      _
    $region33: #{encoder_forward.1} parent=1 // pred_fallthru
      _
    %1930 = vsyncpa [#allocation3], 1

</llo_original>
